<compile_context>
chip_gen: v7x
topology: tpu7x:2x2x1
jax: 0.10.0
libtpu: 0.0.40
codegen_flags: <defaults>
</compile_context>

<pallas_src>
import jax
import jax.numpy as jnp
from jax import lax
from jax.experimental import pallas as pl
from jax.experimental.pallas import tpu as pltpu

BN_EPS = 1e-5
LANE = 128                       # channel dim padded to one lane tile
VMEM_LIMIT = 32 * 1024 * 1024    # explicit scoped-VMEM budget (v5e/v6e/v7x safe)


def _round_up(x, m):
    return ((x + m - 1) // m) * m


def _pick_row_tile(h, w):
    """Largest row tile TH (divisor of H) with ~<=1024 rows per tile."""
    th = h
    while th % 2 == 0 and th * w > 1024:
        th //= 2
    # Keep >= 2 row tiles when that still leaves a decent tile, so the M axis
    # is genuinely tiled/pipelined even at small spatial sizes.
    if th == h and h % 2 == 0 and (h // 2) * w >= 128:
        th = h // 2
    return th


# ------------------------------ Pallas kernels ------------------------------

def _grouped_conv_stats_kernel(x_ref, w_ref, y_ref, stats_ref):
    """One (image, row-tile) grid step of the grouped 3x3 conv (stride 1, pad 1).

    x_ref:     (1, TH+2, W+2, Cp_in)  input stripe incl. 1-row/col halo
    w_ref:     (9, Cp_in, Cp_out)     block-diagonal (grouped) tap weights
    y_ref:     (1, TH, W, Cp_out)     raw conv output tile (lane-dense)
    stats_ref: (1, 2, Cp_out)         per-tile [sum; sum of squares] over rows
    """
    th, w_out, cp_out = y_ref.shape[1], y_ref.shape[2], y_ref.shape[3]
    xs = x_ref[0]                                   # (TH+2, W+2, Cp_in)
    acc = None
    # 3x3 conv as 9 accumulated MXU matmuls over shifted windows; the conv
    # bias is intentionally omitted (BN mean subtraction cancels it exactly).
    for ky in range(3):
        for kx in range(3):
            tap = xs[ky:ky + th, kx:kx + w_out, :]  # (TH, W, Cp_in)
            tap = tap.reshape(th * w_out, tap.shape[-1])
            part = jnp.dot(tap, w_ref[ky * 3 + kx],
                           preferred_element_type=jnp.float32)
            acc = part if acc is None else acc + part
    y_ref[0] = acc.reshape(th, w_out, cp_out)
    # Per-tile partial BatchNorm statistics (globally reduced in plain JAX).
    ssum = jnp.sum(acc, axis=0, keepdims=True)
    ssq = jnp.sum(acc * acc, axis=0, keepdims=True)
    stats_ref[0] = jnp.concatenate([ssum, ssq], axis=0)


def _bn_relu_kernel(y_ref, scale_ref, shift_ref, o_ref):
    """Tiled elementwise y * scale + shift -> ReLU (lane-dense in/out)."""
    o_ref[0] = jnp.maximum(y_ref[0] * scale_ref[...] + shift_ref[...], 0.0)


# ------------------------------- JAX wrappers --------------------------------

def _pack_grouped_weights(w, groups, cp_in, cp_out):
    """Torch layout (Cout, Cin_g, 3, 3) -> block-diagonal (9, Cp_in, Cp_out)."""
    cout, cin_g = w.shape[0], w.shape[1]
    cout_g = cout // groups
    wr = w.reshape(groups, cout_g, cin_g, 3, 3).astype(jnp.float32)
    wr = jnp.transpose(wr, (3, 4, 0, 2, 1)).reshape(9, groups, cin_g, cout_g)
    wt = jnp.zeros((9, cp_in, cp_out), jnp.float32)
    for g in range(groups):
        wt = wt.at[:, g * cin_g:(g + 1) * cin_g,
                   g * cout_g:(g + 1) * cout_g].set(wr[:, g])
    return wt


def conv_bn_relu_layer(a, w, gamma, beta, groups):
    """a: (N, H, W, Cp_in) channel-padded NHWC f32 -> (N, H, W, Cp_out)."""
    n, h, wd, cp_in = a.shape
    cout = w.shape[0]
    cp_out = _round_up(cout, LANE)
    th = _pick_row_tile(h, wd)
    n_rt = h // th

    # Overlapping row stripes with the 3x3 halo: (N*n_rt, TH+2, W+2, Cp_in).
    # Only 2 halo rows per tile are duplicated, replacing the 9x im2col slab.
    ap = jnp.pad(a, ((0, 0), (1, 1), (1, 1), (0, 0)))
    stripes = jnp.concatenate(
        [ap[:, t * th:t * th + th + 2][:, None] for t in range(n_rt)], axis=1)
    stripes = stripes.reshape(n * n_rt, th + 2, wd + 2, cp_in)

    w_taps = _pack_grouped_weights(w, groups, cp_in, cp_out)

    cparams = pltpu.CompilerParams(
        dimension_semantics=("parallel", "parallel"),   # megacore-shardable
        vmem_limit_bytes=VMEM_LIMIT)

    # Pass 1: grouped conv (9 accumulated matmuls) + per-tile BN partial sums.
    # TODO(synk): for production sizes, replace the stripe duplication with a
    # manual halo DMA (memory_space=pl.ANY) and sweep pipeline_mode=Buffered(3).
    y, stats = pl.pallas_call(
        _grouped_conv_stats_kernel,
        out_shape=(jax.ShapeDtypeStruct((n, h, wd, cp_out), jnp.float32),
                   jax.ShapeDtypeStruct((n * n_rt, 2, cp_out), jnp.float32)),
        grid_spec=pltpu.PrefetchScalarGridSpec(
            num_scalar_prefetch=0,
            grid=(n, n_rt),
            in_specs=[
                pl.BlockSpec((1, th + 2, wd + 2, cp_in),
                             lambda i, t: (i * n_rt + t, 0, 0, 0)),
                pl.BlockSpec((9, cp_in, cp_out), lambda i, t: (0, 0, 0)),
            ],
            out_specs=[
                pl.BlockSpec((1, th, wd, cp_out), lambda i, t: (i, t, 0, 0)),
                pl.BlockSpec((1, 2, cp_out),
                             lambda i, t: (i * n_rt + t, 0, 0)),
            ]),
        compiler_params=cparams,
    )(stripes, w_taps)

    # Fold global training-mode BN statistics into per-channel scale / shift.
    count = jnp.float32(n * h * wd)
    total = jnp.sum(stats, axis=0)                      # (2, Cp_out)
    mean = total[0] / count
    var = jnp.maximum(total[1] / count - mean * mean, 0.0)   # biased variance
    gamma_p = jnp.zeros((cp_out,), jnp.float32).at[:cout].set(gamma)
    beta_p = jnp.zeros((cp_out,), jnp.float32).at[:cout].set(beta)
    scale = gamma_p * lax.rsqrt(var + BN_EPS)
    shift = beta_p - mean * scale

    # Pass 2: tiled elementwise normalize + ReLU.
    out = pl.pallas_call(
        _bn_relu_kernel,
        out_shape=jax.ShapeDtypeStruct((n, h, wd, cp_out), jnp.float32),
        grid_spec=pltpu.PrefetchScalarGridSpec(
            num_scalar_prefetch=0,
            grid=(n, n_rt),
            in_specs=[
                pl.BlockSpec((1, th, wd, cp_out), lambda i, t: (i, t, 0, 0)),
                pl.BlockSpec((1, cp_out), lambda i, t: (0, 0)),
                pl.BlockSpec((1, cp_out), lambda i, t: (0, 0)),
            ],
            out_specs=pl.BlockSpec((1, th, wd, cp_out),
                                   lambda i, t: (i, t, 0, 0))),
        compiler_params=cparams,
    )(y, scale.reshape(1, cp_out), shift.reshape(1, cp_out))
    return out


def basic_block_forward(x_nchw, params, num_groups):
    """NCHW in -> NCHW out; matches BasicBlock(...)(x) in train() mode."""
    x = jnp.transpose(x_nchw, (0, 2, 3, 1)).astype(jnp.float32)     # NHWC
    cin = x.shape[-1]
    a = jnp.pad(x, ((0, 0), (0, 0), (0, 0), (0, _round_up(cin, LANE) - cin)))
    for p in params:
        a = conv_bn_relu_layer(a, p["w"], p["gamma"], p["beta"], num_groups)
    cout = params[-1]["w"].shape[0]
    return jnp.transpose(a[..., :cout], (0, 3, 1, 2))


# --------------------------- parameter construction --------------------------

def init_conv_bn_params(key, cin, cout, groups):
    kw, kb = jax.random.split(key)
    fan_in = (cin // groups) * 9
    bound = 1.0 / float(fan_in) ** 0.5
    w = jax.random.uniform(kw, (cout, cin // groups, 3, 3), jnp.float32,
                           -bound, bound)
    b = jax.random.uniform(kb, (cout,), jnp.float32, -bound, bound)
    return dict(w=w, b=b, gamma=jnp.ones((cout,), jnp.float32),
                beta=jnp.zeros((cout,), jnp.float32))


def build_basic_block_params(key, in_channels, out_channels,
                             num_conv_layers, num_groups):
    mid = (in_channels + out_channels) // 2
    k0, k1, k2 = jax.random.split(key, 3)
    params = [init_conv_bn_params(k0, in_channels, mid, num_groups)]
    # PyTorch `[conv, bn, relu] * (num_conv_layers - 2)` repeats the SAME
    # module objects, so all middle layers share one parameter set.
    mid_params = init_conv_bn_params(k1, mid, mid, num_groups)
    params += [mid_params] * (num_conv_layers - 2)
    params += [init_conv_bn_params(k2, mid, out_channels, num_groups)]
    return params


# ------------------------------ pure-JAX reference ---------------------------

def reference_forward(x_nchw, params, num_groups):
    x = jnp.transpose(x_nchw, (0, 2, 3, 1)).astype(jnp.float32)
    for p in params:
        w_hwio = jnp.transpose(p["w"], (2, 3, 1, 0))
        y = lax.conv_general_dilated(
            x, w_hwio, window_strides=(1, 1), padding=((1, 1), (1, 1)),
            dimension_numbers=("NHWC", "HWIO", "NHWC"),
            feature_group_count=num_groups)
        y = y + p["b"]
        mean = jnp.mean(y, axis=(0, 1, 2), keepdims=True)
        var = jnp.mean(jnp.square(y - mean), axis=(0, 1, 2), keepdims=True)
        y = (y - mean) * lax.rsqrt(var + BN_EPS) * p["gamma"] + p["beta"]
        x = jnp.maximum(y, 0.0)
    return jnp.transpose(x, (0, 3, 1, 2))


# ------------------------------------ main ------------------------------------

if __name__ == "__main__":
    # BasicBlock(in_channels=4, out_channels=8, num_conv_layers=3, num_groups=2)
    N, CIN, H, W = 2, 4, 16, 16
    COUT, NUM_CONV_LAYERS, NUM_GROUPS = 8, 3, 2

    key = jax.random.PRNGKey(0)
    k_x, k_p = jax.random.split(key)
    x = jax.random.normal(k_x, (N, CIN, H, W), dtype=jnp.float32)     # NCHW
    params = build_basic_block_params(k_p, CIN, COUT, NUM_CONV_LAYERS,
                                      NUM_GROUPS)

    fwd = jax.jit(basic_block_forward, static_argnums=(2,))
    out = jax.block_until_ready(fwd(x, params, NUM_GROUPS))

    ref = jax.block_until_ready(reference_forward(x, params, NUM_GROUPS))
    assert out.shape == (N, COUT, H, W), out.shape
    err = float(jnp.max(jnp.abs(out - ref)))
    # f32 everywhere; slack covers the sum/sumsq BN formulation and the
    # differing conv summation order on the MXU.
    assert err < 1e-3, err
    print("KERNEL_OK")
</pallas_src>

<mosaic_0001>
module attributes {stable_mosaic.version = 11 : i64} {
  func.func @_grouped_conv_stats_kernel(%arg0: i32, %arg1: i32, %arg2: memref<1x10x18x128xf32, #tpu.memory_space<vmem>>, %arg3: memref<9x128x128xf32, #tpu.memory_space<vmem>>, %arg4: memref<1x8x16x128xf32, #tpu.memory_space<vmem>>, %arg5: memref<1x2x128xf32, #tpu.memory_space<vmem>>) attributes {dimension_semantics = [#tpu.dimension_semantics<parallel>, #tpu.dimension_semantics<parallel>], iteration_bounds = array<i64: 2, 2>, scalar_prefetch = 0 : i64, scratch_operands = 0 : i64, tpu.core_type = #tpu.core_type<tc>, window_params = [{transform_indices = @transform_0, window_bounds = array<i64: 1, 10, 18, 128>}, {pipeline_mode = #tpu.pipeline_mode<synchronous>, transform_indices = @transform_1, window_bounds = array<i64: 9, 128, 128>}, {transform_indices = @transform_2, window_bounds = array<i64: 1, 8, 16, 128>}, {transform_indices = @transform_3, window_bounds = array<i64: 1, 2, 128>}]} {
    %c0 = arith.constant 0 : index
    %c0_0 = arith.constant 0 : index
    %c0_1 = arith.constant 0 : index
    %c0_2 = arith.constant 0 : index
    %0 = vector.load %arg2[%c0, %c0_0, %c0_1, %c0_2] : memref<1x10x18x128xf32, #tpu.memory_space<vmem>>, vector<1x10x18x128xf32>
    %1 = vector.shape_cast %0 : vector<1x10x18x128xf32> to vector<10x18x128xf32>
    %2 = vector.extract_strided_slice %1 {offsets = [0, 0, 0], sizes = [8, 16, 128], strides = [1, 1, 1]} : vector<10x18x128xf32> to vector<8x16x128xf32>
    %3 = vector.shape_cast %2 : vector<8x16x128xf32> to vector<128x128xf32>
    %c0_3 = arith.constant 0 : index
    %c0_4 = arith.constant 0 : index
    %c0_5 = arith.constant 0 : index
    %4 = vector.load %arg3[%c0_3, %c0_4, %c0_5] : memref<9x128x128xf32, #tpu.memory_space<vmem>>, vector<1x128x128xf32>
    %5 = vector.shape_cast %4 : vector<1x128x128xf32> to vector<128x128xf32>
    %cst = arith.constant dense<0.000000e+00> : vector<128x128xf32>
    %6 = tpu.matmul %3, %5, %cst {dimension_numbers = #tpu.dot_dimension_numbers<[1], [0], [0], [1], [0, 0, 1, 1], [], []>} : vector<128x128xf32>, vector<128x128xf32>, vector<128x128xf32> -> vector<128x128xf32>
    %7 = vector.extract_strided_slice %1 {offsets = [0, 1, 0], sizes = [8, 16, 128], strides = [1, 1, 1]} : vector<10x18x128xf32> to vector<8x16x128xf32>
    %8 = vector.shape_cast %7 : vector<8x16x128xf32> to vector<128x128xf32>
    %c1 = arith.constant 1 : index
    %c0_6 = arith.constant 0 : index
    %c0_7 = arith.constant 0 : index
    %9 = vector.load %arg3[%c1, %c0_6, %c0_7] : memref<9x128x128xf32, #tpu.memory_space<vmem>>, vector<1x128x128xf32>
    %10 = vector.shape_cast %9 : vector<1x128x128xf32> to vector<128x128xf32>
    %cst_8 = arith.constant dense<0.000000e+00> : vector<128x128xf32>
    %11 = tpu.matmul %8, %10, %cst_8 {dimension_numbers = #tpu.dot_dimension_numbers<[1], [0], [0], [1], [0, 0, 1, 1], [], []>} : vector<128x128xf32>, vector<128x128xf32>, vector<128x128xf32> -> vector<128x128xf32>
    %12 = arith.addf %6, %11 : vector<128x128xf32>
    %13 = vector.extract_strided_slice %1 {offsets = [0, 2, 0], sizes = [8, 16, 128], strides = [1, 1, 1]} : vector<10x18x128xf32> to vector<8x16x128xf32>
    %14 = vector.shape_cast %13 : vector<8x16x128xf32> to vector<128x128xf32>
    %c2 = arith.constant 2 : index
    %c0_9 = arith.constant 0 : index
    %c0_10 = arith.constant 0 : index
    %15 = vector.load %arg3[%c2, %c0_9, %c0_10] : memref<9x128x128xf32, #tpu.memory_space<vmem>>, vector<1x128x128xf32>
    %16 = vector.shape_cast %15 : vector<1x128x128xf32> to vector<128x128xf32>
    %cst_11 = arith.constant dense<0.000000e+00> : vector<128x128xf32>
    %17 = tpu.matmul %14, %16, %cst_11 {dimension_numbers = #tpu.dot_dimension_numbers<[1], [0], [0], [1], [0, 0, 1, 1], [], []>} : vector<128x128xf32>, vector<128x128xf32>, vector<128x128xf32> -> vector<128x128xf32>
    %18 = arith.addf %12, %17 : vector<128x128xf32>
    %19 = vector.extract_strided_slice %1 {offsets = [1, 0, 0], sizes = [8, 16, 128], strides = [1, 1, 1]} : vector<10x18x128xf32> to vector<8x16x128xf32>
    %20 = vector.shape_cast %19 : vector<8x16x128xf32> to vector<128x128xf32>
    %c3 = arith.constant 3 : index
    %c0_12 = arith.constant 0 : index
    %c0_13 = arith.constant 0 : index
    %21 = vector.load %arg3[%c3, %c0_12, %c0_13] : memref<9x128x128xf32, #tpu.memory_space<vmem>>, vector<1x128x128xf32>
    %22 = vector.shape_cast %21 : vector<1x128x128xf32> to vector<128x128xf32>
    %cst_14 = arith.constant dense<0.000000e+00> : vector<128x128xf32>
    %23 = tpu.matmul %20, %22, %cst_14 {dimension_numbers = #tpu.dot_dimension_numbers<[1], [0], [0], [1], [0, 0, 1, 1], [], []>} : vector<128x128xf32>, vector<128x128xf32>, vector<128x128xf32> -> vector<128x128xf32>
    %24 = arith.addf %18, %23 : vector<128x128xf32>
    %25 = vector.extract_strided_slice %1 {offsets = [1, 1, 0], sizes = [8, 16, 128], strides = [1, 1, 1]} : vector<10x18x128xf32> to vector<8x16x128xf32>
    %26 = vector.shape_cast %25 : vector<8x16x128xf32> to vector<128x128xf32>
    %c4 = arith.constant 4 : index
    %c0_15 = arith.constant 0 : index
    %c0_16 = arith.constant 0 : index
    %27 = vector.load %arg3[%c4, %c0_15, %c0_16] : memref<9x128x128xf32, #tpu.memory_space<vmem>>, vector<1x128x128xf32>
    %28 = vector.shape_cast %27 : vector<1x128x128xf32> to vector<128x128xf32>
    %cst_17 = arith.constant dense<0.000000e+00> : vector<128x128xf32>
    %29 = tpu.matmul %26, %28, %cst_17 {dimension_numbers = #tpu.dot_dimension_numbers<[1], [0], [0], [1], [0, 0, 1, 1], [], []>} : vector<128x128xf32>, vector<128x128xf32>, vector<128x128xf32> -> vector<128x128xf32>
    %30 = arith.addf %24, %29 : vector<128x128xf32>
    %31 = vector.extract_strided_slice %1 {offsets = [1, 2, 0], sizes = [8, 16, 128], strides = [1, 1, 1]} : vector<10x18x128xf32> to vector<8x16x128xf32>
    %32 = vector.shape_cast %31 : vector<8x16x128xf32> to vector<128x128xf32>
    %c5 = arith.constant 5 : index
    %c0_18 = arith.constant 0 : index
    %c0_19 = arith.constant 0 : index
    %33 = vector.load %arg3[%c5, %c0_18, %c0_19] : memref<9x128x128xf32, #tpu.memory_space<vmem>>, vector<1x128x128xf32>
    %34 = vector.shape_cast %33 : vector<1x128x128xf32> to vector<128x128xf32>
    %cst_20 = arith.constant dense<0.000000e+00> : vector<128x128xf32>
    %35 = tpu.matmul %32, %34, %cst_20 {dimension_numbers = #tpu.dot_dimension_numbers<[1], [0], [0], [1], [0, 0, 1, 1], [], []>} : vector<128x128xf32>, vector<128x128xf32>, vector<128x128xf32> -> vector<128x128xf32>
    %36 = arith.addf %30, %35 : vector<128x128xf32>
    %37 = vector.extract_strided_slice %1 {offsets = [2, 0, 0], sizes = [8, 16, 128], strides = [1, 1, 1]} : vector<10x18x128xf32> to vector<8x16x128xf32>
    %38 = vector.shape_cast %37 : vector<8x16x128xf32> to vector<128x128xf32>
    %c6 = arith.constant 6 : index
    %c0_21 = arith.constant 0 : index
    %c0_22 = arith.constant 0 : index
    %39 = vector.load %arg3[%c6, %c0_21, %c0_22] : memref<9x128x128xf32, #tpu.memory_space<vmem>>, vector<1x128x128xf32>
    %40 = vector.shape_cast %39 : vector<1x128x128xf32> to vector<128x128xf32>
    %cst_23 = arith.constant dense<0.000000e+00> : vector<128x128xf32>
    %41 = tpu.matmul %38, %40, %cst_23 {dimension_numbers = #tpu.dot_dimension_numbers<[1], [0], [0], [1], [0, 0, 1, 1], [], []>} : vector<128x128xf32>, vector<128x128xf32>, vector<128x128xf32> -> vector<128x128xf32>
    %42 = arith.addf %36, %41 : vector<128x128xf32>
    %43 = vector.extract_strided_slice %1 {offsets = [2, 1, 0], sizes = [8, 16, 128], strides = [1, 1, 1]} : vector<10x18x128xf32> to vector<8x16x128xf32>
    %44 = vector.shape_cast %43 : vector<8x16x128xf32> to vector<128x128xf32>
    %c7 = arith.constant 7 : index
    %c0_24 = arith.constant 0 : index
    %c0_25 = arith.constant 0 : index
    %45 = vector.load %arg3[%c7, %c0_24, %c0_25] : memref<9x128x128xf32, #tpu.memory_space<vmem>>, vector<1x128x128xf32>
    %46 = vector.shape_cast %45 : vector<1x128x128xf32> to vector<128x128xf32>
    %cst_26 = arith.constant dense<0.000000e+00> : vector<128x128xf32>
    %47 = tpu.matmul %44, %46, %cst_26 {dimension_numbers = #tpu.dot_dimension_numbers<[1], [0], [0], [1], [0, 0, 1, 1], [], []>} : vector<128x128xf32>, vector<128x128xf32>, vector<128x128xf32> -> vector<128x128xf32>
    %48 = arith.addf %42, %47 : vector<128x128xf32>
    %49 = vector.extract_strided_slice %1 {offsets = [2, 2, 0], sizes = [8, 16, 128], strides = [1, 1, 1]} : vector<10x18x128xf32> to vector<8x16x128xf32>
    %50 = vector.shape_cast %49 : vector<8x16x128xf32> to vector<128x128xf32>
    %c8 = arith.constant 8 : index
    %c0_27 = arith.constant 0 : index
    %c0_28 = arith.constant 0 : index
    %51 = vector.load %arg3[%c8, %c0_27, %c0_28] : memref<9x128x128xf32, #tpu.memory_space<vmem>>, vector<1x128x128xf32>
    %52 = vector.shape_cast %51 : vector<1x128x128xf32> to vector<128x128xf32>
    %cst_29 = arith.constant dense<0.000000e+00> : vector<128x128xf32>
    %53 = tpu.matmul %50, %52, %cst_29 {dimension_numbers = #tpu.dot_dimension_numbers<[1], [0], [0], [1], [0, 0, 1, 1], [], []>} : vector<128x128xf32>, vector<128x128xf32>, vector<128x128xf32> -> vector<128x128xf32>
    %54 = arith.addf %48, %53 : vector<128x128xf32>
    %55 = vector.shape_cast %54 : vector<128x128xf32> to vector<8x16x128xf32>
    %c0_30 = arith.constant 0 : index
    %c0_31 = arith.constant 0 : index
    %c0_32 = arith.constant 0 : index
    %c0_33 = arith.constant 0 : index
    %56 = vector.load %arg4[%c0_30, %c0_31, %c0_32, %c0_33] : memref<1x8x16x128xf32, #tpu.memory_space<vmem>>, vector<1x8x16x128xf32>
    %57 = vector.shape_cast %56 : vector<1x8x16x128xf32> to vector<8x16x128xf32>
    %58 = vector.shape_cast %55 : vector<8x16x128xf32> to vector<1x8x16x128xf32>
    tpu.vector_store %arg4[%c0_30, %c0_31, %c0_32, %c0_33], %58 {strides = array<i32>} : memref<1x8x16x128xf32, #tpu.memory_space<vmem>>, vector<1x8x16x128xf32>,
    %cst_34 = arith.constant dense<0.000000e+00> : vector<128xf32>
    %59 = vector.multi_reduction <add>, %54, %cst_34 [0] : vector<128x128xf32> to vector<128xf32>
    %60 = vector.shape_cast %59 : vector<128xf32> to vector<1x128xf32>
    %61 = arith.mulf %54, %54 : vector<128x128xf32>
    %cst_35 = arith.constant dense<0.000000e+00> : vector<128xf32>
    %62 = vector.multi_reduction <add>, %61, %cst_35 [0] : vector<128x128xf32> to vector<128xf32>
    %63 = vector.shape_cast %62 : vector<128xf32> to vector<1x128xf32>
    %64 = tpu.concatenate %60, %63 in 0 : vector<1x128xf32>, vector<1x128xf32> -> vector<2x128xf32>
    %c0_36 = arith.constant 0 : index
    %c0_37 = arith.constant 0 : index
    %c0_38 = arith.constant 0 : index
    %65 = vector.load %arg5[%c0_36, %c0_37, %c0_38] : memref<1x2x128xf32, #tpu.memory_space<vmem>>, vector<1x2x128xf32>
    %66 = vector.shape_cast %65 : vector<1x2x128xf32> to vector<2x128xf32>
    %67 = vector.shape_cast %64 : vector<2x128xf32> to vector<1x2x128xf32>
    tpu.vector_store %arg5[%c0_36, %c0_37, %c0_38], %67 {strides = array<i32>} : memref<1x2x128xf32, #tpu.memory_space<vmem>>, vector<1x2x128xf32>,
    return
  }
  func.func @transform_0(%arg0: i32, %arg1: i32) -> (i32, i32, i32, i32) {
    %c2_i32 = arith.constant 2 : i32
    %0 = arith.muli %arg0, %c2_i32 : i32
    %1 = arith.addi %0, %arg1 : i32
    %c0_i32 = arith.constant 0 : i32
    %c0_i32_0 = arith.constant 0 : i32
    %c0_i32_1 = arith.constant 0 : i32
    %c0_i32_2 = arith.constant 0 : i32
    return %1, %c0_i32, %c0_i32_0, %c0_i32_1 : i32, i32, i32, i32
  }
  func.func @transform_1(%arg0: i32, %arg1: i32) -> (i32, i32, i32) {
    %c0_i32 = arith.constant 0 : i32
    %c0_i32_0 = arith.constant 0 : i32
    %c0_i32_1 = arith.constant 0 : i32
    %c0_i32_2 = arith.constant 0 : i32
    return %c0_i32, %c0_i32_0, %c0_i32_1 : i32, i32, i32
  }
  func.func @transform_2(%arg0: i32, %arg1: i32) -> (i32, i32, i32, i32) {
    %c0_i32 = arith.constant 0 : i32
    %c0_i32_0 = arith.constant 0 : i32
    %c0_i32_1 = arith.constant 0 : i32
    return %arg0, %arg1, %c0_i32, %c0_i32_0 : i32, i32, i32, i32
  }
  func.func @transform_3(%arg0: i32, %arg1: i32) -> (i32, i32, i32) {
    %c2_i32 = arith.constant 2 : i32
    %0 = arith.muli %arg0, %c2_i32 : i32
    %1 = arith.addi %0, %arg1 : i32
    %c0_i32 = arith.constant 0 : i32
    %c0_i32_0 = arith.constant 0 : i32
    %c0_i32_1 = arith.constant 0 : i32
    return %1, %c0_i32, %c0_i32_0 : i32, i32, i32
  }
}

module attributes {stable_mosaic.version = 11 : i64} {
  func.func @_bn_relu_kernel(%arg0: i32, %arg1: i32, %arg2: memref<1x8x16x128xf32, #tpu.memory_space<vmem>>, %arg3: memref<1x128xf32, #tpu.memory_space<vmem>>, %arg4: memref<1x128xf32, #tpu.memory_space<vmem>>, %arg5: memref<1x8x16x128xf32, #tpu.memory_space<vmem>>) attributes {dimension_semantics = [#tpu.dimension_semantics<parallel>, #tpu.dimension_semantics<parallel>], iteration_bounds = array<i64: 2, 2>, scalar_prefetch = 0 : i64, scratch_operands = 0 : i64, tpu.core_type = #tpu.core_type<tc>, window_params = [{transform_indices = @transform_0, window_bounds = array<i64: 1, 8, 16, 128>}, {pipeline_mode = #tpu.pipeline_mode<synchronous>, transform_indices = @transform_1, window_bounds = array<i64: 1, 128>}, {pipeline_mode = #tpu.pipeline_mode<synchronous>, transform_indices = @transform_2, window_bounds = array<i64: 1, 128>}, {transform_indices = @transform_3, window_bounds = array<i64: 1, 8, 16, 128>}]} {
    %c0 = arith.constant 0 : index
    %c0_0 = arith.constant 0 : index
    %c0_1 = arith.constant 0 : index
    %c0_2 = arith.constant 0 : index
    %0 = vector.load %arg2[%c0, %c0_0, %c0_1, %c0_2] : memref<1x8x16x128xf32, #tpu.memory_space<vmem>>, vector<1x8x16x128xf32>
    %1 = vector.shape_cast %0 : vector<1x8x16x128xf32> to vector<8x16x128xf32>
    %c0_3 = arith.constant 0 : index
    %c0_4 = arith.constant 0 : index
    %2 = vector.load %arg3[%c0_3, %c0_4] : memref<1x128xf32, #tpu.memory_space<vmem>>, vector<1x128xf32>
    %3 = vector.shape_cast %2 : vector<1x128xf32> to vector<1x1x128xf32>
    %4 = vector.broadcast %3 : vector<1x1x128xf32> to vector<8x16x128xf32>
    %5 = arith.mulf %1, %4 : vector<8x16x128xf32>
    %c0_5 = arith.constant 0 : index
    %c0_6 = arith.constant 0 : index
    %6 = vector.load %arg4[%c0_5, %c0_6] : memref<1x128xf32, #tpu.memory_space<vmem>>, vector<1x128xf32>
    %7 = vector.shape_cast %6 : vector<1x128xf32> to vector<1x1x128xf32>
    %8 = vector.broadcast %7 : vector<1x1x128xf32> to vector<8x16x128xf32>
    %9 = arith.addf %5, %8 : vector<8x16x128xf32>
    %cst = arith.constant 0.000000e+00 : f32
    %10 = vector.broadcast %cst : f32 to vector<8x16x128xf32>
    %11 = arith.maximumf %9, %10 : vector<8x16x128xf32>
    %c0_7 = arith.constant 0 : index
    %c0_8 = arith.constant 0 : index
    %c0_9 = arith.constant 0 : index
    %c0_10 = arith.constant 0 : index
    %12 = vector.load %arg5[%c0_7, %c0_8, %c0_9, %c0_10] : memref<1x8x16x128xf32, #tpu.memory_space<vmem>>, vector<1x8x16x128xf32>
    %13 = vector.shape_cast %12 : vector<1x8x16x128xf32> to vector<8x16x128xf32>
    %14 = vector.shape_cast %11 : vector<8x16x128xf32> to vector<1x8x16x128xf32>
    tpu.vector_store %arg5[%c0_7, %c0_8, %c0_9, %c0_10], %14 {strides = array<i32>} : memref<1x8x16x128xf32, #tpu.memory_space<vmem>>, vector<1x8x16x128xf32>,
    return
  }
  func.func @transform_0(%arg0: i32, %arg1: i32) -> (i32, i32, i32, i32) {
    %c0_i32 = arith.constant 0 : i32
    %c0_i32_0 = arith.constant 0 : i32
    %c0_i32_1 = arith.constant 0 : i32
    return %arg0, %arg1, %c0_i32, %c0_i32_0 : i32, i32, i32, i32
  }
  func.func @transform_1(%arg0: i32, %arg1: i32) -> (i32, i32) {
    %c0_i32 = arith.constant 0 : i32
    %c0_i32_0 = arith.constant 0 : i32
    %c0_i32_1 = arith.constant 0 : i32
    return %c0_i32, %c0_i32_0 : i32, i32
  }
  func.func @transform_2(%arg0: i32, %arg1: i32) -> (i32, i32) {
    %c0_i32 = arith.constant 0 : i32
    %c0_i32_0 = arith.constant 0 : i32
    %c0_i32_1 = arith.constant 0 : i32
    return %c0_i32, %c0_i32_0 : i32, i32
  }
  func.func @transform_3(%arg0: i32, %arg1: i32) -> (i32, i32, i32, i32) {
    %c0_i32 = arith.constant 0 : i32
    %c0_i32_0 = arith.constant 0 : i32
    %c0_i32_1 = arith.constant 0 : i32
    return %arg0, %arg1, %c0_i32, %c0_i32_0 : i32, i32, i32, i32
  }
}

</mosaic_0001>

<llo_original>
// kernel: basic_block_forward.7
$region0: #{basic_block_forward.7}
  #allocation0 [shape = 'u32[]', space=smem, size = 0x4, offset = 0x4, fixed_abs, tag = 'smem constant byte address 0x4 - core index']
  #allocation1 [shape = 'u32[144,128]{1,0:T(1,128)}', space=vmem, size = 0x12000, scoped, tag = 'internal scratch']
  %s0 = inlined_call_operand.vmem [shape: f32[2,16,16,128], index: 0, kind: input, shape index: {}]
  %s1 = inlined_call_operand.vmem [shape: f32[1,128], index: 1, kind: input, shape index: {}]
  %s2 = inlined_call_operand.vmem [shape: f32[1,128], index: 2, kind: input, shape index: {}]
  %s3 = inlined_call_operand.vmem [shape: f32[2,16,16,128], index: 3, kind: output, shape index: {}]
  %s4 = sld [smem:[#allocation0]]
  $region45: #{basic_block_forward.7} parent=0
    _
  %s6 = ssub.s32 1, %s4
  %s7 = scalar_select 0, %s6, %s4
  loop: start=0, step=1, limit=6
  $region2: #{basic_block_forward.7} parent=0 // loop_pre_header
    _
  $region3: #{basic_block_forward.7} parent=0 // loop_header
    %s9 = sphi 0, %s13
    %p10 = scmp.ge.s32.totalorder %s9, 6
    %s16 = sphi 0, %s28
    %s17 = sphi 0, %s24
    %s18 = sphi 0, %s16
    %s19 = sphi 0, %s17
    %s20 = sphi 0, %s18
    %s21 = sphi 0, %s19
    %s33 = sphi 0, %s35
    %s36 = sphi 0, %s33
    %s37 = sphi 0, %s36
    %s53 = sphi 0, %s37
    %s57 = sphi 0, %s57
    %s59 = sphi 0, %s57
    %s60 = sphi 0, %s59
    %s74 = sphi 0, %s60
    %s78 = sphi 0, %s78
    %s80 = sphi 0, %s78
    %s81 = sphi 0, %s80
    %s95 = sphi 0, %s81
    %s103 = sphi 0, %s105
    %s106 = sphi 0, %s103
    %s107 = sphi 0, %s106
    %s123 = sphi 0, %s107
  $region4: #{basic_block_forward.7} parent=0 // loop_header_branch
    %12 = sbr.rel (%p10) target = $region8
  $region5: #{basic_block_forward.7} parent=0 // loop_body
    %s14 = ssub.s32 %s9, 1
    %s15 = ssub.s32 %s9, 2
    %s22 = sadd.s32 1, %s17
    %p23 = scmp.ge.s32.totalorder %s22, 2
    %s24 = scalar_select %p23, 0, %s22
    %s25 = sadd.s32 1, %s16
    %s26 = scalar_select %p23, %s25, %s16
    %p27 = scmp.ge.s32.totalorder %s26, 2
    %s28 = scalar_select %p27, 0, %s26
    %s29 = ssub.s32 %s16, %s28
    %s30 = ssub.s32 %s17, %s24
    %s31 = sor.u32 %s29, %s30
    %p32 = scmp.eq.s32.totalorder %s31, 0
    %s34 = sadd.s32 %s33, 1
    %s35 = scalar_select %p32, %s33, %s34
    %p38 = pneg %p32
    %p39 = scmp.eq.s32.totalorder %s9, 3
    %p40 = por %p38, %p39
    %p41 = scmp.ne.s32.totalorder %s33, %s36
    %p42 = scmp.eq.s32.totalorder %s9, 0
    %p43 = por %p41, %p42
    %p44 = scmp.ne.s32.totalorder %s33, %s36
    %p45 = scmp.eq.s32.totalorder %s14, 3
    %p46 = por %p44, %p45
    %p47 = scmp.ne.s32.totalorder %s36, %s37
    %p48 = scmp.eq.s32.totalorder %s14, 0
    %p49 = por %p47, %p48
    %p50 = scmp.ne.s32.totalorder %s36, %s37
    %p51 = scmp.eq.s32.totalorder %s15, 3
    %p52 = por %p50, %p51
    %p54 = scmp.ne.s32.totalorder %s37, %s53
    %p55 = scmp.eq.s32.totalorder %s15, 0
    %p56 = por %p54, %p55
    %s58 = sadd.s32 %s57, 1
    %p61 = scmp.eq.s32.totalorder %s9, 3
    %p62 = scmp.ne.s32.totalorder %s57, %s59
    %p63 = scmp.eq.s32.totalorder %s9, 0
    %p64 = por %p62, %p63
    %p65 = scmp.ne.s32.totalorder %s57, %s59
    %p66 = scmp.eq.s32.totalorder %s14, 3
    %p67 = por %p65, %p66
    %p68 = scmp.ne.s32.totalorder %s59, %s60
    %p69 = scmp.eq.s32.totalorder %s14, 0
    %p70 = por %p68, %p69
    %p71 = scmp.ne.s32.totalorder %s59, %s60
    %p72 = scmp.eq.s32.totalorder %s15, 3
    %p73 = por %p71, %p72
    %p75 = scmp.ne.s32.totalorder %s60, %s74
    %p76 = scmp.eq.s32.totalorder %s15, 0
    %p77 = por %p75, %p76
    %s79 = sadd.s32 %s78, 1
    %p82 = scmp.eq.s32.totalorder %s9, 3
    %p83 = scmp.ne.s32.totalorder %s78, %s80
    %p84 = scmp.eq.s32.totalorder %s9, 0
    %p85 = por %p83, %p84
    %p86 = scmp.ne.s32.totalorder %s78, %s80
    %p87 = scmp.eq.s32.totalorder %s14, 3
    %p88 = por %p86, %p87
    %p89 = scmp.ne.s32.totalorder %s80, %s81
    %p90 = scmp.eq.s32.totalorder %s14, 0
    %p91 = por %p89, %p90
    %p92 = scmp.ne.s32.totalorder %s80, %s81
    %p93 = scmp.eq.s32.totalorder %s15, 3
    %p94 = por %p92, %p93
    %p96 = scmp.ne.s32.totalorder %s81, %s95
    %p97 = scmp.eq.s32.totalorder %s15, 0
    %p98 = por %p96, %p97
    %s99 = ssub.s32 %s16, %s28
    %s100 = ssub.s32 %s17, %s24
    %s101 = sor.u32 %s99, %s100
    %p102 = scmp.eq.s32.totalorder %s101, 0
    %s104 = sadd.s32 %s103, 1
    %s105 = scalar_select %p102, %s103, %s104
    %p108 = pneg %p102
    %p109 = scmp.eq.s32.totalorder %s9, 3
    %p110 = por %p108, %p109
    %p111 = scmp.ne.s32.totalorder %s103, %s106
    %p112 = scmp.eq.s32.totalorder %s9, 0
    %p113 = por %p111, %p112
    %p114 = scmp.ne.s32.totalorder %s103, %s106
    %p115 = scmp.eq.s32.totalorder %s14, 3
    %p116 = por %p114, %p115
    %p117 = scmp.ne.s32.totalorder %s106, %s107
    %p118 = scmp.eq.s32.totalorder %s14, 0
    %p119 = por %p117, %p118
    %p120 = scmp.ne.s32.totalorder %s106, %s107
    %p121 = scmp.eq.s32.totalorder %s15, 3
    %p122 = por %p120, %p121
    %p124 = scmp.ne.s32.totalorder %s107, %s123
    %p125 = scmp.eq.s32.totalorder %s15, 0
    %p126 = por %p124, %p125
    %p127 = scmp.le.s32.totalorder 1, %s9
    %p128 = scmp.lt.s32.totalorder %s9, 5
    %p129 = pnand %p127, %p128
    %p130 = pneg %p129
    // Predicated region
    $region9: #{basic_block_forward.7} parent=5 // pred_check
      _
    $region10: #{basic_block_forward.7} parent=5 // pred_check_branch
      %132 = sbr.rel (%p129) target = $region12
    $region11: #{basic_block_forward.7} parent=5 // pred_region
      %s133 = ssub.s32 %s9, 1
      // Predicated region
      $region13: #{basic_block_forward.7} parent=11 // pred_check
        %p134 = pneg %p70
      $region14: #{basic_block_forward.7} parent=11 // pred_check_branch
        %136 = sbr.rel (%p134) target = $region16
      $region15: #{basic_block_forward.7} parent=11 // pred_region
        _
      $region16: #{basic_block_forward.7} parent=11 // pred_fallthru
        _
      // Predicated region
      $region17: #{basic_block_forward.7} parent=11 // pred_check
        %p137 = pneg %p91
      $region18: #{basic_block_forward.7} parent=11 // pred_check_branch
        %139 = sbr.rel (%p137) target = $region20
      $region19: #{basic_block_forward.7} parent=11 // pred_region
        _
      $region20: #{basic_block_forward.7} parent=11 // pred_fallthru
        _
    $region12: #{basic_block_forward.7} parent=5 // pred_fallthru
      _
    %p140 = scmp.lt.s32.totalorder %s9, 4
    // Predicated region
    $region21: #{basic_block_forward.7} parent=5 // pred_check
      %p141 = pneg %p140
    $region22: #{basic_block_forward.7} parent=5 // pred_check_branch
      %143 = sbr.rel (%p141) target = $region24
    $region23: #{basic_block_forward.7} parent=5 // pred_region
      // Predicated region
      $region25: #{basic_block_forward.7} parent=23 // pred_check
        %p144 = pneg %p43
      $region26: #{basic_block_forward.7} parent=23 // pred_check_branch
        %146 = sbr.rel (%p144) target = $region28
      $region27: #{basic_block_forward.7} parent=23 // pred_region
        %s147 = smul.u32 8, %s17
        %p148 = scmp.lt.s32.totalorder %s16, 1
        %s149 = scalar_select %p148, %s16, 1
        %p150 = scmp.lt.s32.totalorder %s147, 15
        %s151 = scalar_select %p150, %s147, 15
        %s152 = smul.addr %s151, 2
        %s153 = smul.addr %s149, 32
        %s154 = sadd.s32 %s152, %s153
        %s155 = smul.addr %s154, 8
        %s156 = scalar_lea.vmem %s0, %s155
        %s157 = smul.u32 8, %s17
      $region28: #{basic_block_forward.7} parent=23 // pred_fallthru
        _
    $region24: #{basic_block_forward.7} parent=5 // pred_fallthru
      _
    %p158 = scmp.le.s32.totalorder 1, %s9
    %p159 = scmp.lt.s32.totalorder %s9, 5
    %p160 = pnand %p158, %p159
    %p161 = pneg %p160
    // Predicated region
    $region29: #{basic_block_forward.7} parent=5 // pred_check
      _
    $region30: #{basic_block_forward.7} parent=5 // pred_check_branch
      %163 = sbr.rel (%p160) target = $region32
    $region31: #{basic_block_forward.7} parent=5 // pred_region
      %s164 = ssub.s32 %s9, 1
      %s165 = smul.u32 8, %s19
      %p166 = scmp.lt.s32.totalorder %s18, 1
      %s167 = scalar_select %p166, %s18, 1
      %p168 = scmp.lt.s32.totalorder %s165, 15
      %s169 = scalar_select %p168, %s165, 15
      %s170 = smul.addr %s169, 2
      %s171 = smul.addr %s167, 32
      %s172 = sadd.s32 %s170, %s171
      %s173 = smul.addr %s172, 8
      %s174 = scalar_lea.vmem %s0, %s173
      %p175 = pneg %p49
      %p176 = pneg %p46
      %p177 = pneg %p70
      %p178 = pneg %p67
      %p179 = pneg %p91
      %p180 = pneg %p88
      %p181 = pneg %p119
      %p182 = pneg %p116
      %s183 = smul.u32 8, %s19
      %p184 = scmp.lt.s32.totalorder %s18, 1
      %s185 = scalar_select %p184, %s18, 1
      %p186 = scmp.lt.s32.totalorder %s183, 15
      %s187 = scalar_select %p186, %s183, 15
      %s188 = smul.addr %s187, 2
      %s189 = smul.addr %s185, 32
      %s190 = sadd.s32 %s188, %s189
      %s191 = smul.addr %s190, 8
      %s192 = scalar_lea.vmem %s3, %s191
      %s193 = smul.u32 8, %s19
      %p194 = scmp.lt.s32.totalorder %s18, 1
      %s195 = scalar_select %p194, %s18, 1
      %p196 = scmp.lt.s32.totalorder %s193, 15
      %s197 = scalar_select %p196, %s193, 15
      %s198 = smul.addr %s197, 2
      %s199 = smul.addr %s195, 32
      %s200 = sadd.s32 %s198, %s199
      %s201 = smul.addr %s200, 8
      %s202 = scalar_lea.vmem %s0, %s201
      %s203 = smul.u32 8, %s19
      %s204 = smul.u32 8, %s19
      %p205 = scmp.lt.s32.totalorder %s18, 1
      %s206 = scalar_select %p205, %s18, 1
      %p207 = scmp.lt.s32.totalorder %s204, 15
      %s208 = scalar_select %p207, %s204, 15
      %s209 = smul.addr %s208, 2
      %s210 = smul.addr %s206, 32
      %s211 = sadd.s32 %s209, %s210
      %s212 = smul.addr %s211, 8
      %s213 = scalar_lea.vmem %s3, %s212
      %s214 = smul.u32 8, %s19
      %v215 = vld [vmem:[%s202] sm:$0xff]
      %v216 = vld [vmem:[%s202 + $0x8] sm:$0xff]
      %v217 = vld [vmem:[%s202 + $0x10] sm:$0xff]
      %v218 = vld [vmem:[%s202 + $0x18] sm:$0xff]
      %v219 = vld [vmem:[%s202 + $0x20] sm:$0xff]
      %v220 = vld [vmem:[%s202 + $0x28] sm:$0xff]
      %v221 = vld [vmem:[%s202 + $0x30] sm:$0xff]
      %v222 = vld [vmem:[%s202 + $0x38] sm:$0xff]
      %v223 = vld [vmem:[%s202 + $0x40] sm:$0xff]
      %v224 = vld [vmem:[%s202 + $0x48] sm:$0xff]
      %v225 = vld [vmem:[%s202 + $0x50] sm:$0xff]
      %v226 = vld [vmem:[%s202 + $0x58] sm:$0xff]
      %v227 = vld [vmem:[%s202 + $0x60] sm:$0xff]
      %v228 = vld [vmem:[%s202 + $0x68] sm:$0xff]
      %v229 = vld [vmem:[%s202 + $0x70] sm:$0xff]
      %v230 = vld [vmem:[%s202 + $0x78] sm:$0xff]
      %v231 = vld [vmem:[%s1] sm:$0x1]
      %v233 = vlaneseq
      %v234 = vshrl.u32 %v233, 7
      %v235 = vsub.s32 0, %v234
      %v236 = vrot.slane %v231, %v235
      %v238 = vmul.f32 %v215, %v236
      %v239 = vmul.f32 %v216, %v236
      %v240 = vmul.f32 %v217, %v236
      %v241 = vmul.f32 %v218, %v236
      %v242 = vmul.f32 %v219, %v236
      %v243 = vmul.f32 %v220, %v236
      %v244 = vmul.f32 %v221, %v236
      %v245 = vmul.f32 %v222, %v236
      %v246 = vmul.f32 %v223, %v236
      %v247 = vmul.f32 %v224, %v236
      %v248 = vmul.f32 %v225, %v236
      %v249 = vmul.f32 %v226, %v236
      %v250 = vmul.f32 %v227, %v236
      %v251 = vmul.f32 %v228, %v236
      %v252 = vmul.f32 %v229, %v236
      %v253 = vmul.f32 %v230, %v236
      %v254 = vld [vmem:[%s2] sm:$0x1]
      %v256 = vlaneseq
      %v257 = vshrl.u32 %v256, 7
      %v258 = vsub.s32 0, %v257
      %v259 = vrot.slane %v254, %v258
      %v261 = vadd.f32 %v238, %v259
      %v262 = vadd.f32 %v239, %v259
      %v263 = vadd.f32 %v240, %v259
      %v264 = vadd.f32 %v241, %v259
      %v265 = vadd.f32 %v242, %v259
      %v266 = vadd.f32 %v243, %v259
      %v267 = vadd.f32 %v244, %v259
      %v268 = vadd.f32 %v245, %v259
      %v269 = vadd.f32 %v246, %v259
      %v270 = vadd.f32 %v247, %v259
      %v271 = vadd.f32 %v248, %v259
      %v272 = vadd.f32 %v249, %v259
      %v273 = vadd.f32 %v250, %v259
      %v274 = vadd.f32 %v251, %v259
      %v275 = vadd.f32 %v252, %v259
      %v276 = vadd.f32 %v253, %v259
      %v277 = vmax.f32 %v261, 0.0
      %v278 = vmax.f32 %v262, 0.0
      %v279 = vmax.f32 %v263, 0.0
      %v280 = vmax.f32 %v264, 0.0
      %v281 = vmax.f32 %v265, 0.0
      %v282 = vmax.f32 %v266, 0.0
      %v283 = vmax.f32 %v267, 0.0
      %v284 = vmax.f32 %v268, 0.0
      %v285 = vmax.f32 %v269, 0.0
      %v286 = vmax.f32 %v270, 0.0
      %v287 = vmax.f32 %v271, 0.0
      %v288 = vmax.f32 %v272, 0.0
      %v289 = vmax.f32 %v273, 0.0
      %v290 = vmax.f32 %v274, 0.0
      %v291 = vmax.f32 %v275, 0.0
      %v292 = vmax.f32 %v276, 0.0
      %293 = vst [vmem:[%s213] sm:$0xff] %v277
      %294 = vst [vmem:[%s213 + $0x8] sm:$0xff] %v278
      %295 = vst [vmem:[%s213 + $0x10] sm:$0xff] %v279
      %296 = vst [vmem:[%s213 + $0x18] sm:$0xff] %v280
      %297 = vst [vmem:[%s213 + $0x20] sm:$0xff] %v281
      %298 = vst [vmem:[%s213 + $0x28] sm:$0xff] %v282
      %299 = vst [vmem:[%s213 + $0x30] sm:$0xff] %v283
      %300 = vst [vmem:[%s213 + $0x38] sm:$0xff] %v284
      %301 = vst [vmem:[%s213 + $0x40] sm:$0xff] %v285
      %302 = vst [vmem:[%s213 + $0x48] sm:$0xff] %v286
      %303 = vst [vmem:[%s213 + $0x50] sm:$0xff] %v287
      %304 = vst [vmem:[%s213 + $0x58] sm:$0xff] %v288
      %305 = vst [vmem:[%s213 + $0x60] sm:$0xff] %v289
      %306 = vst [vmem:[%s213 + $0x68] sm:$0xff] %v290
      %307 = vst [vmem:[%s213 + $0x70] sm:$0xff] %v291
      %308 = vst [vmem:[%s213 + $0x78] sm:$0xff] %v292
      %s309 = smul.u32 8, %s19
      %p310 = scmp.lt.s32.totalorder %s18, 1
      %s311 = scalar_select %p310, %s18, 1
      %p312 = scmp.lt.s32.totalorder %s309, 15
      %s313 = scalar_select %p312, %s309, 15
      %s314 = smul.addr %s313, 2
      %s315 = smul.addr %s311, 32
      %s316 = sadd.s32 %s314, %s315
      %s317 = smul.addr %s316, 8
      %s318 = scalar_lea.vmem %s3, %s317
      // Predicated region
      $region33: #{basic_block_forward.7} parent=31 // pred_check
        %p319 = pneg %p116
      $region34: #{basic_block_forward.7} parent=31 // pred_check_branch
        %321 = sbr.rel (%p319) target = $region36
      $region35: #{basic_block_forward.7} parent=31 // pred_region
        %s322 = smul.u32 8, %s19
      $region36: #{basic_block_forward.7} parent=31 // pred_fallthru
        _
    $region32: #{basic_block_forward.7} parent=5 // pred_fallthru
      _
    %p323 = scmp.le.s32.totalorder 2, %s9
    // Predicated region
    $region37: #{basic_block_forward.7} parent=5 // pred_check
      %p324 = pneg %p323
    $region38: #{basic_block_forward.7} parent=5 // pred_check_branch
      %326 = sbr.rel (%p324) target = $region40
    $region39: #{basic_block_forward.7} parent=5 // pred_region
      %s327 = ssub.s32 %s9, 2
      // Predicated region
      $region41: #{basic_block_forward.7} parent=39 // pred_check
        %p328 = pneg %p122
      $region42: #{basic_block_forward.7} parent=39 // pred_check_branch
        %330 = sbr.rel (%p328) target = $region44
      $region43: #{basic_block_forward.7} parent=39 // pred_region
        %s331 = smul.u32 8, %s21
        %p332 = scmp.lt.s32.totalorder %s20, 1
        %s333 = scalar_select %p332, %s20, 1
        %p334 = scmp.lt.s32.totalorder %s331, 15
        %s335 = scalar_select %p334, %s331, 15
        %s336 = smul.addr %s335, 2
        %s337 = smul.addr %s333, 32
        %s338 = sadd.s32 %s336, %s337
        %s339 = smul.addr %s338, 8
        %s340 = scalar_lea.vmem %s3, %s339
      $region44: #{basic_block_forward.7} parent=39 // pred_fallthru
        _
    $region40: #{basic_block_forward.7} parent=5 // pred_fallthru
      _
  $region6: #{basic_block_forward.7} parent=0 // loop_footer
    %s13 = sadd.s32 1, %s9
  $region7: #{basic_block_forward.7} parent=0 // loop_footer_branch
    %8 = sbr.rel target = $region3
  $region8: #{basic_block_forward.7} parent=0 // loop_exit
    _

// kernel: basic_block_forward.6
$region0: #{basic_block_forward.6}
  #allocation0 [shape = 'u32[]', space=smem, size = 0x4, offset = 0x4, fixed_abs, tag = 'smem constant byte address 0x4 - core index']
  #allocation1 [shape = 'u32[144,128]{1,0:T(1,128)}', space=vmem, size = 0x12000, scoped, tag = 'internal scratch']
  %s0 = inlined_call_operand.vmem [shape: f32[4,10,18,128], index: 0, kind: input, shape index: {}]
  %s1 = inlined_call_operand.vmem [shape: f32[9,128,128], index: 1, kind: input, shape index: {}]
  %s2 = inlined_call_operand.vmem [shape: f32[2,16,16,128], index: 2, kind: output, shape index: {0}]
  %s3 = inlined_call_operand.vmem [shape: f32[4,2,128], index: 3, kind: output, shape index: {1}]
  %4 = xla_tuple %s2, %s3
  %s5 = sld [smem:[#allocation0]]
  $region49: #{basic_block_forward.6} parent=0
    _
  %s7 = ssub.s32 1, %s5
  %s8 = scalar_select 0, %s7, %s5
  loop: start=0, step=1, limit=6
  $region2: #{basic_block_forward.6} parent=0 // loop_pre_header
    _
  $region3: #{basic_block_forward.6} parent=0 // loop_header
    %s10 = sphi 0, %s14
    %p11 = scmp.ge.s32.totalorder %s10, 6
    %s17 = sphi 0, %s29
    %s18 = sphi 0, %s25
    %s19 = sphi 0, %s17
    %s20 = sphi 0, %s18
    %s21 = sphi 0, %s19
    %s22 = sphi 0, %s20
    %s36 = sphi 0, %s38
    %s39 = sphi 0, %s36
    %s40 = sphi 0, %s39
    %s56 = sphi 0, %s40
    %s60 = sphi 0, %s60
    %s62 = sphi 0, %s60
    %s63 = sphi 0, %s62
    %s77 = sphi 0, %s63
    %s85 = sphi 0, %s87
    %s88 = sphi 0, %s85
    %s89 = sphi 0, %s88
    %s105 = sphi 0, %s89
    %s115 = sphi 0, %s117
    %s118 = sphi 0, %s115
    %s119 = sphi 0, %s118
    %s135 = sphi 0, %s119
  $region4: #{basic_block_forward.6} parent=0 // loop_header_branch
    %13 = sbr.rel (%p11) target = $region8
  $region5: #{basic_block_forward.6} parent=0 // loop_body
    %s15 = ssub.s32 %s10, 1
    %s16 = ssub.s32 %s10, 2
    %s23 = sadd.s32 1, %s18
    %p24 = scmp.ge.s32.totalorder %s23, 2
    %s25 = scalar_select %p24, 0, %s23
    %s26 = sadd.s32 1, %s17
    %s27 = scalar_select %p24, %s26, %s17
    %p28 = scmp.ge.s32.totalorder %s27, 2
    %s29 = scalar_select %p28, 0, %s27
    %s30 = smul.u32 %s17, 2
    %s31 = sadd.s32 %s30, %s18
    %s32 = smul.u32 %s29, 2
    %s33 = sadd.s32 %s32, %s25
    %s34 = ssub.s32 %s31, %s33
    %p35 = scmp.eq.s32.totalorder %s34, 0
    %s37 = sadd.s32 %s36, 1
    %s38 = scalar_select %p35, %s36, %s37
    %p41 = pneg %p35
    %p42 = scmp.eq.s32.totalorder %s10, 3
    %p43 = por %p41, %p42
    %p44 = scmp.ne.s32.totalorder %s36, %s39
    %p45 = scmp.eq.s32.totalorder %s10, 0
    %p46 = por %p44, %p45
    %p47 = scmp.ne.s32.totalorder %s36, %s39
    %p48 = scmp.eq.s32.totalorder %s15, 3
    %p49 = por %p47, %p48
    %p50 = scmp.ne.s32.totalorder %s39, %s40
    %p51 = scmp.eq.s32.totalorder %s15, 0
    %p52 = por %p50, %p51
    %p53 = scmp.ne.s32.totalorder %s39, %s40
    %p54 = scmp.eq.s32.totalorder %s16, 3
    %p55 = por %p53, %p54
    %p57 = scmp.ne.s32.totalorder %s40, %s56
    %p58 = scmp.eq.s32.totalorder %s16, 0
    %p59 = por %p57, %p58
    %s61 = sadd.s32 %s60, 1
    %p64 = scmp.eq.s32.totalorder %s10, 3
    %p65 = scmp.ne.s32.totalorder %s60, %s62
    %p66 = scmp.eq.s32.totalorder %s10, 0
    %p67 = por %p65, %p66
    %p68 = scmp.ne.s32.totalorder %s60, %s62
    %p69 = scmp.eq.s32.totalorder %s15, 3
    %p70 = por %p68, %p69
    %p71 = scmp.ne.s32.totalorder %s62, %s63
    %p72 = scmp.eq.s32.totalorder %s15, 0
    %p73 = por %p71, %p72
    %p74 = scmp.ne.s32.totalorder %s62, %s63
    %p75 = scmp.eq.s32.totalorder %s16, 3
    %p76 = por %p74, %p75
    %p78 = scmp.ne.s32.totalorder %s63, %s77
    %p79 = scmp.eq.s32.totalorder %s16, 0
    %p80 = por %p78, %p79
    %s81 = ssub.s32 %s17, %s29
    %s82 = ssub.s32 %s18, %s25
    %s83 = sor.u32 %s81, %s82
    %p84 = scmp.eq.s32.totalorder %s83, 0
    %s86 = sadd.s32 %s85, 1
    %s87 = scalar_select %p84, %s85, %s86
    %p90 = pneg %p84
    %p91 = scmp.eq.s32.totalorder %s10, 3
    %p92 = por %p90, %p91
    %p93 = scmp.ne.s32.totalorder %s85, %s88
    %p94 = scmp.eq.s32.totalorder %s10, 0
    %p95 = por %p93, %p94
    %p96 = scmp.ne.s32.totalorder %s85, %s88
    %p97 = scmp.eq.s32.totalorder %s15, 3
    %p98 = por %p96, %p97
    %p99 = scmp.ne.s32.totalorder %s88, %s89
    %p100 = scmp.eq.s32.totalorder %s15, 0
    %p101 = por %p99, %p100
    %p102 = scmp.ne.s32.totalorder %s88, %s89
    %p103 = scmp.eq.s32.totalorder %s16, 3
    %p104 = por %p102, %p103
    %p106 = scmp.ne.s32.totalorder %s89, %s105
    %p107 = scmp.eq.s32.totalorder %s16, 0
    %p108 = por %p106, %p107
    %s109 = smul.u32 %s17, 2
    %s110 = sadd.s32 %s109, %s18
    %s111 = smul.u32 %s29, 2
    %s112 = sadd.s32 %s111, %s25
    %s113 = ssub.s32 %s110, %s112
    %p114 = scmp.eq.s32.totalorder %s113, 0
    %s116 = sadd.s32 %s115, 1
    %s117 = scalar_select %p114, %s115, %s116
    %p120 = pneg %p114
    %p121 = scmp.eq.s32.totalorder %s10, 3
    %p122 = por %p120, %p121
    %p123 = scmp.ne.s32.totalorder %s115, %s118
    %p124 = scmp.eq.s32.totalorder %s10, 0
    %p125 = por %p123, %p124
    %p126 = scmp.ne.s32.totalorder %s115, %s118
    %p127 = scmp.eq.s32.totalorder %s15, 3
    %p128 = por %p126, %p127
    %p129 = scmp.ne.s32.totalorder %s118, %s119
    %p130 = scmp.eq.s32.totalorder %s15, 0
    %p131 = por %p129, %p130
    %p132 = scmp.ne.s32.totalorder %s118, %s119
    %p133 = scmp.eq.s32.totalorder %s16, 3
    %p134 = por %p132, %p133
    %p136 = scmp.ne.s32.totalorder %s119, %s135
    %p137 = scmp.eq.s32.totalorder %s16, 0
    %p138 = por %p136, %p137
    %p139 = scmp.le.s32.totalorder 1, %s10
    %p140 = scmp.lt.s32.totalorder %s10, 5
    %p141 = pnand %p139, %p140
    %p142 = pneg %p141
    // Predicated region
    $region9: #{basic_block_forward.6} parent=5 // pred_check
      _
    $region10: #{basic_block_forward.6} parent=5 // pred_check_branch
      %144 = sbr.rel (%p141) target = $region12
    $region11: #{basic_block_forward.6} parent=5 // pred_region
      %s145 = ssub.s32 %s10, 1
      // Predicated region
      $region13: #{basic_block_forward.6} parent=11 // pred_check
        %p146 = pneg %p73
      $region14: #{basic_block_forward.6} parent=11 // pred_check_branch
        %148 = sbr.rel (%p146) target = $region16
      $region15: #{basic_block_forward.6} parent=11 // pred_region
        _
      $region16: #{basic_block_forward.6} parent=11 // pred_fallthru
        _
    $region12: #{basic_block_forward.6} parent=5 // pred_fallthru
      _
    %p149 = scmp.lt.s32.totalorder %s10, 4
    // Predicated region
    $region17: #{basic_block_forward.6} parent=5 // pred_check
      %p150 = pneg %p149
    $region18: #{basic_block_forward.6} parent=5 // pred_check_branch
      %152 = sbr.rel (%p150) target = $region20
    $region19: #{basic_block_forward.6} parent=5 // pred_region
      // Predicated region
      $region21: #{basic_block_forward.6} parent=19 // pred_check
        %p153 = pneg %p46
      $region22: #{basic_block_forward.6} parent=19 // pred_check_branch
        %155 = sbr.rel (%p153) target = $region24
      $region23: #{basic_block_forward.6} parent=19 // pred_region
        %s156 = smul.u32 %s17, 2
        %s157 = sadd.s32 %s156, %s18
        %p158 = scmp.lt.s32.totalorder %s157, 3
        %s159 = scalar_select %p158, %s157, 3
        %s160 = smul.addr %s159, 30
        %s161 = smul.addr %s160, 8
        %s162 = scalar_lea.vmem %s0, %s161
        %s163 = smul.u32 %s17, 2
        %s164 = sadd.s32 %s163, %s18
      $region24: #{basic_block_forward.6} parent=19 // pred_fallthru
        _
    $region20: #{basic_block_forward.6} parent=5 // pred_fallthru
      _
    %p165 = scmp.le.s32.totalorder 1, %s10
    %p166 = scmp.lt.s32.totalorder %s10, 5
    %p167 = pnand %p165, %p166
    %p168 = pneg %p167
    // Predicated region
    $region25: #{basic_block_forward.6} parent=5 // pred_check
      _
    $region26: #{basic_block_forward.6} parent=5 // pred_check_branch
      %170 = sbr.rel (%p167) target = $region28
    $region27: #{basic_block_forward.6} parent=5 // pred_region
      %s171 = ssub.s32 %s10, 1
      %s172 = smul.u32 %s19, 2
      %s173 = sadd.s32 %s172, %s20
      %p174 = scmp.lt.s32.totalorder %s173, 3
      %s175 = scalar_select %p174, %s173, 3
      %s176 = smul.addr %s175, 30
      %s177 = smul.addr %s176, 8
      %s178 = scalar_lea.vmem %s0, %s177
      %p179 = pneg %p52
      %p180 = pneg %p49
      %p181 = pneg %p73
      %p182 = pneg %p70
      %p183 = pneg %p101
      %p184 = pneg %p98
      %s185 = smul.u32 8, %s20
      %p186 = scmp.lt.s32.totalorder %s19, 1
      %s187 = scalar_select %p186, %s19, 1
      %p188 = scmp.lt.s32.totalorder %s185, 15
      %s189 = scalar_select %p188, %s185, 15
      %s190 = smul.addr %s189, 2
      %s191 = smul.addr %s187, 32
      %s192 = sadd.s32 %s190, %s191
      %s193 = smul.addr %s192, 8
      %s194 = scalar_lea.vmem %s2, %s193
      %p195 = pneg %p131
      %p196 = pneg %p128
      %s197 = smul.u32 %s19, 2
      %s198 = sadd.s32 %s197, %s20
      %p199 = scmp.lt.s32.totalorder %s198, 3
      %s200 = scalar_select %p199, %s198, 3
      %s201 = smul.addr %s200, 2
      %s202 = scalar_lea.vmem %s3, %s201
      %s203 = smul.u32 %s19, 2
      %s204 = sadd.s32 %s203, %s20
      %p205 = scmp.lt.s32.totalorder %s204, 3
      %s206 = scalar_select %p205, %s204, 3
      %s207 = smul.addr %s206, 30
      %s208 = smul.addr %s207, 8
      %s209 = scalar_lea.vmem %s0, %s208
      %s210 = smul.u32 %s19, 2
      %s211 = sadd.s32 %s210, %s20
      %s212 = smul.u32 8, %s20
      %p213 = scmp.lt.s32.totalorder %s19, 1
      %s214 = scalar_select %p213, %s19, 1
      %p215 = scmp.lt.s32.totalorder %s212, 15
      %s216 = scalar_select %p215, %s212, 15
      %s217 = smul.addr %s216, 2
      %s218 = smul.addr %s214, 32
      %s219 = sadd.s32 %s217, %s218
      %s220 = smul.addr %s219, 8
      %s221 = scalar_lea.vmem %s2, %s220
      %s222 = smul.u32 8, %s20
      %s223 = smul.u32 %s19, 2
      %s224 = sadd.s32 %s223, %s20
      %p225 = scmp.lt.s32.totalorder %s224, 3
      %s226 = scalar_select %p225, %s224, 3
      %s227 = smul.addr %s226, 2
      %s228 = scalar_lea.vmem %s3, %s227
      %s229 = smul.u32 %s19, 2
      %s230 = sadd.s32 %s229, %s20
      %v231 = vld [vmem:[%s209] sm:$0xff]
      %v232 = vld [vmem:[%s209 + $0x8] sm:$0xff]
      %v233 = vld [vmem:[%s209 + $0x10] sm:$0x3]
      %v234 = vld [vmem:[%s209 + $0x18] sm:$0xff]
      %v235 = vld [vmem:[%s209 + $0x20] sm:$0xff]
      %v236 = vld [vmem:[%s209 + $0x28] sm:$0x3]
      %v237 = vld [vmem:[%s209 + $0x30] sm:$0xff]
      %v238 = vld [vmem:[%s209 + $0x38] sm:$0xff]
      %v239 = vld [vmem:[%s209 + $0x40] sm:$0x3]
      %v240 = vld [vmem:[%s209 + $0x48] sm:$0xff]
      %v241 = vld [vmem:[%s209 + $0x50] sm:$0xff]
      %v242 = vld [vmem:[%s209 + $0x58] sm:$0x3]
      %v243 = vld [vmem:[%s209 + $0x60] sm:$0xff]
      %v244 = vld [vmem:[%s209 + $0x68] sm:$0xff]
      %v245 = vld [vmem:[%s209 + $0x70] sm:$0x3]
      %v246 = vld [vmem:[%s209 + $0x78] sm:$0xff]
      %v247 = vld [vmem:[%s209 + $0x80] sm:$0xff]
      %v248 = vld [vmem:[%s209 + $0x88] sm:$0x3]
      %v249 = vld [vmem:[%s209 + $0x90] sm:$0xff]
      %v250 = vld [vmem:[%s209 + $0x98] sm:$0xff]
      %v251 = vld [vmem:[%s209 + $0xa0] sm:$0x3]
      %v252 = vld [vmem:[%s209 + $0xa8] sm:$0xff]
      %v253 = vld [vmem:[%s209 + $0xb0] sm:$0xff]
      %v254 = vld [vmem:[%s209 + $0xb8] sm:$0x3]
      %v255 = vld [vmem:[%s209 + $0xc0] sm:$0xff]
      %v256 = vld [vmem:[%s209 + $0xc8] sm:$0xff]
      %v257 = vld [vmem:[%s209 + $0xd0] sm:$0x3]
      %v258 = vld [vmem:[%s209 + $0xd8] sm:$0xff]
      %v259 = vld [vmem:[%s209 + $0xe0] sm:$0xff]
      %v260 = vld [vmem:[%s209 + $0xe8] sm:$0x3]
      %v261 = vld [vmem:[%s1] sm:$0xff]
      %v262 = vld [vmem:[%s1 + $0x8] sm:$0xff]
      %v263 = vld [vmem:[%s1 + $0x10] sm:$0xff]
      %v264 = vld [vmem:[%s1 + $0x18] sm:$0xff]
      %v265 = vld [vmem:[%s1 + $0x20] sm:$0xff]
      %v266 = vld [vmem:[%s1 + $0x28] sm:$0xff]
      %v267 = vld [vmem:[%s1 + $0x30] sm:$0xff]
      %v268 = vld [vmem:[%s1 + $0x38] sm:$0xff]
      %v269 = vld [vmem:[%s1 + $0x40] sm:$0xff]
      %v270 = vld [vmem:[%s1 + $0x48] sm:$0xff]
      %v271 = vld [vmem:[%s1 + $0x50] sm:$0xff]
      %v272 = vld [vmem:[%s1 + $0x58] sm:$0xff]
      %v273 = vld [vmem:[%s1 + $0x60] sm:$0xff]
      %v274 = vld [vmem:[%s1 + $0x68] sm:$0xff]
      %v275 = vld [vmem:[%s1 + $0x70] sm:$0xff]
      %v276 = vld [vmem:[%s1 + $0x78] sm:$0xff]
      %vm301 = vcmask 1046528
      %v302 = vrot.slane %v231, 1
      %v303 = vrot.slane %v232, 1
      %v304 = vsel %vm301, %v302, %v303
      %v305 = vrot.slane %v233, 1
      %v306 = vsel %vm301, %v303, %v305
      %v307 = vrot.slane %v234, 1
      %v308 = vrot.slane %v235, 1
      %v309 = vsel %vm301, %v307, %v308
      %v310 = vrot.slane %v236, 1
      %v311 = vsel %vm301, %v308, %v310
      %v312 = vrot.slane %v237, 1
      %v313 = vrot.slane %v238, 1
      %v314 = vsel %vm301, %v312, %v313
      %v315 = vrot.slane %v239, 1
      %v316 = vsel %vm301, %v313, %v315
      %v317 = vrot.slane %v240, 1
      %v318 = vrot.slane %v241, 1
      %v319 = vsel %vm301, %v317, %v318
      %v320 = vrot.slane %v242, 1
      %v321 = vsel %vm301, %v318, %v320
      %v322 = vrot.slane %v243, 1
      %v323 = vrot.slane %v244, 1
      %v324 = vsel %vm301, %v322, %v323
      %v325 = vrot.slane %v245, 1
      %v326 = vsel %vm301, %v323, %v325
      %v327 = vrot.slane %v246, 1
      %v328 = vrot.slane %v247, 1
      %v329 = vsel %vm301, %v327, %v328
      %v330 = vrot.slane %v248, 1
      %v331 = vsel %vm301, %v328, %v330
      %v332 = vrot.slane %v249, 1
      %v333 = vrot.slane %v250, 1
      %v334 = vsel %vm301, %v332, %v333
      %v335 = vrot.slane %v251, 1
      %v336 = vsel %vm301, %v333, %v335
      %v337 = vrot.slane %v252, 1
      %v338 = vrot.slane %v253, 1
      %v339 = vsel %vm301, %v337, %v338
      %v340 = vrot.slane %v254, 1
      %v341 = vsel %vm301, %v338, %v340
      %s358 = scalar_lea.vmem %s1, 128
      %v359 = vld [vmem:[%s358] sm:$0xff]
      %v360 = vld [vmem:[%s358 + $0x8] sm:$0xff]
      %v361 = vld [vmem:[%s358 + $0x10] sm:$0xff]
      %v362 = vld [vmem:[%s358 + $0x18] sm:$0xff]
      %v363 = vld [vmem:[%s358 + $0x20] sm:$0xff]
      %v364 = vld [vmem:[%s358 + $0x28] sm:$0xff]
      %v365 = vld [vmem:[%s358 + $0x30] sm:$0xff]
      %v366 = vld [vmem:[%s358 + $0x38] sm:$0xff]
      %v367 = vld [vmem:[%s358 + $0x40] sm:$0xff]
      %v368 = vld [vmem:[%s358 + $0x48] sm:$0xff]
      %v369 = vld [vmem:[%s358 + $0x50] sm:$0xff]
      %v370 = vld [vmem:[%s358 + $0x58] sm:$0xff]
      %v371 = vld [vmem:[%s358 + $0x60] sm:$0xff]
      %v372 = vld [vmem:[%s358 + $0x68] sm:$0xff]
      %v373 = vld [vmem:[%s358 + $0x70] sm:$0xff]
      %v374 = vld [vmem:[%s358 + $0x78] sm:$0xff]
      %375 = vmatprep.subr.mxu0 0.0
      %376 = vmatpush1.msra.mxu0 %v359
      %377 = vmatprep.subr.mxu0 0.0
      %378 = vmatpush1.msra.mxu0 %v360
      %379 = vmatprep.subr.mxu0 0.0
      %380 = vmatpush1.msra.mxu0 %v361
      %381 = vmatprep.subr.mxu0 0.0
      %382 = vmatpush1.msra.mxu0 %v362
      %383 = vmatprep.subr.mxu0 0.0
      %384 = vmatpush1.msra.mxu0 %v363
      %385 = vmatprep.subr.mxu0 0.0
      %386 = vmatpush1.msra.mxu0 %v364
      %387 = vmatprep.subr.mxu0 0.0
      %388 = vmatpush1.msra.mxu0 %v365
      %389 = vmatprep.subr.mxu0 0.0
      %390 = vmatpush1.msra.mxu0 %v366
      %391 = vmatprep.subr.mxu0 0.0
      %392 = vmatpush1.msra.mxu0 %v367
      %393 = vmatprep.subr.mxu0 0.0
      %394 = vmatpush1.msra.mxu0 %v368
      %395 = vmatprep.subr.mxu0 0.0
      %396 = vmatpush1.msra.mxu0 %v369
      %397 = vmatprep.subr.mxu0 0.0
      %398 = vmatpush1.msra.mxu0 %v370
      %399 = vmatprep.subr.mxu0 0.0
      %400 = vmatpush1.msra.mxu0 %v371
      %401 = vmatprep.subr.mxu0 0.0
      %402 = vmatpush1.msra.mxu0 %v372
      %403 = vmatprep.subr.mxu0 0.0
      %404 = vmatpush1.msra.mxu0 %v373
      %405 = vmatprep.subr.mxu0 0.0
      %406 = vmatpush1.msra.mxu0 %v374
      %407 = vmatprep.subr.mxu0 0.0
      %408 = vmatpush1.msra.mxu0 0.0
      %409 = vmatprep.subr.mxu0 0.0
      %410 = vmatpush1.msra.mxu0 0.0
      %411 = vmatprep.subr.mxu0 0.0
      %412 = vmatpush1.msra.mxu0 0.0
      %413 = vmatprep.subr.mxu0 0.0
      %414 = vmatpush1.msra.mxu0 0.0
      %415 = vmatprep.subr.mxu0 0.0
      %416 = vmatpush1.msra.mxu0 0.0
      %417 = vmatprep.subr.mxu0 0.0
      %418 = vmatpush1.msra.mxu0 0.0
      %419 = vmatprep.subr.mxu0 0.0
      %420 = vmatpush1.msra.mxu0 0.0
      %421 = vmatprep.subr.mxu0 0.0
      %422 = vmatpush1.msra.mxu0 0.0
      %423 = vmatprep.subr.mxu0 0.0
      %424 = vmatpush1.msra.mxu0 0.0
      %425 = vmatprep.subr.mxu0 0.0
      %426 = vmatpush1.msra.mxu0 0.0
      %427 = vmatprep.subr.mxu0 0.0
      %428 = vmatpush1.msra.mxu0 0.0
      %429 = vmatprep.subr.mxu0 0.0
      %430 = vmatpush1.msra.mxu0 0.0
      %431 = vmatprep.subr.mxu0 0.0
      %432 = vmatpush1.msra.mxu0 0.0
      %433 = vmatprep.subr.mxu0 0.0
      %434 = vmatpush1.msra.mxu0 0.0
      %435 = vmatprep.subr.mxu0 0.0
      %436 = vmatpush1.msra.mxu0 0.0
      %437 = vmatprep.subr.mxu0 0.0
      %438 = vmatpush1.msra.mxu0 0.0
      %439 = vmatprep.mubr.f32.mxu0 0.0
      %440 = vmatmul.mubr.f32.gmra.mrb[0].mxu0 %v304
      %v441 = vpop.f32.mrb[0].mxu0
      %v442 = vadd.f32 0.0, %v441
      %v443 = vpop.f32.mrb[0].mxu0
      %444 = vmatprep.mubr.f32.mxu0 0.0
      %445 = vmatmul.mubr.f32.gmra.mrb[0].mxu0 %v306
      %v446 = vpop.f32.mrb[0].mxu0
      %v447 = vadd.f32 0.0, %v446
      %v448 = vpop.f32.mrb[0].mxu0
      %449 = vmatprep.mubr.f32.mxu0 0.0
      %450 = vmatmul.mubr.f32.gmra.mrb[0].mxu0 %v309
      %v451 = vpop.f32.mrb[0].mxu0
      %v452 = vadd.f32 0.0, %v451
      %v453 = vpop.f32.mrb[0].mxu0
      %454 = vmatprep.mubr.f32.mxu0 0.0
      %455 = vmatmul.mubr.f32.gmra.mrb[0].mxu0 %v311
      %v456 = vpop.f32.mrb[0].mxu0
      %v457 = vadd.f32 0.0, %v456
      %v458 = vpop.f32.mrb[0].mxu0
      %459 = vmatprep.mubr.f32.mxu0 0.0
      %460 = vmatmul.mubr.f32.gmra.mrb[0].mxu0 %v314
      %v461 = vpop.f32.mrb[0].mxu0
      %v462 = vadd.f32 0.0, %v461
      %v463 = vpop.f32.mrb[0].mxu0
      %464 = vmatprep.mubr.f32.mxu0 0.0
      %465 = vmatmul.mubr.f32.gmra.mrb[0].mxu0 %v316
      %v466 = vpop.f32.mrb[0].mxu0
      %v467 = vadd.f32 0.0, %v466
      %v468 = vpop.f32.mrb[0].mxu0
      %469 = vmatprep.mubr.f32.mxu0 0.0
      %470 = vmatmul.mubr.f32.gmra.mrb[0].mxu0 %v319
      %v471 = vpop.f32.mrb[0].mxu0
      %v472 = vadd.f32 0.0, %v471
      %v473 = vpop.f32.mrb[0].mxu0
      %474 = vmatprep.mubr.f32.mxu0 0.0
      %475 = vmatmul.mubr.f32.gmra.mrb[0].mxu0 %v321
      %v476 = vpop.f32.mrb[0].mxu0
      %v477 = vadd.f32 0.0, %v476
      %v478 = vpop.f32.mrb[0].mxu0
      %479 = vmatprep.mubr.f32.mxu0 0.0
      %480 = vmatmul.mubr.f32.gmra.mrb[0].mxu0 %v324
      %v481 = vpop.f32.mrb[0].mxu0
      %v482 = vadd.f32 0.0, %v481
      %v483 = vpop.f32.mrb[0].mxu0
      %484 = vmatprep.mubr.f32.mxu0 0.0
      %485 = vmatmul.mubr.f32.gmra.mrb[0].mxu0 %v326
      %v486 = vpop.f32.mrb[0].mxu0
      %v487 = vadd.f32 0.0, %v486
      %v488 = vpop.f32.mrb[0].mxu0
      %489 = vmatprep.mubr.f32.mxu0 0.0
      %490 = vmatmul.mubr.f32.gmra.mrb[0].mxu0 %v329
      %v491 = vpop.f32.mrb[0].mxu0
      %v492 = vadd.f32 0.0, %v491
      %v493 = vpop.f32.mrb[0].mxu0
      %494 = vmatprep.mubr.f32.mxu0 0.0
      %495 = vmatmul.mubr.f32.gmra.mrb[0].mxu0 %v331
      %v496 = vpop.f32.mrb[0].mxu0
      %v497 = vadd.f32 0.0, %v496
      %v498 = vpop.f32.mrb[0].mxu0
      %499 = vmatprep.mubr.f32.mxu0 0.0
      %500 = vmatmul.mubr.f32.gmra.mrb[0].mxu0 %v334
      %v501 = vpop.f32.mrb[0].mxu0
      %v502 = vadd.f32 0.0, %v501
      %v503 = vpop.f32.mrb[0].mxu0
      %504 = vmatprep.mubr.f32.mxu0 0.0
      %505 = vmatmul.mubr.f32.gmra.mrb[0].mxu0 %v336
      %v506 = vpop.f32.mrb[0].mxu0
      %v507 = vadd.f32 0.0, %v506
      %v508 = vpop.f32.mrb[0].mxu0
      %509 = vmatprep.mubr.f32.mxu0 0.0
      %510 = vmatmul.mubr.f32.gmra.mrb[0].mxu0 %v339
      %v511 = vpop.f32.mrb[0].mxu0
      %v512 = vadd.f32 0.0, %v511
      %v513 = vpop.f32.mrb[0].mxu0
      %514 = vmatprep.mubr.f32.mxu0 0.0
      %515 = vmatmul.mubr.f32.gmra.mrb[0].mxu0 %v341
      %v516 = vpop.f32.mrb[0].mxu0
      %v517 = vadd.f32 0.0, %v516
      %v518 = vpop.f32.mrb[0].mxu0
      %519 = vdwg.mxu0
      %520 = vmatprep.subr.mxu0 0.0
      %521 = vmatpush1.msra.mxu0 %v261
      %522 = vmatprep.subr.mxu0 0.0
      %523 = vmatpush1.msra.mxu0 %v262
      %524 = vmatprep.subr.mxu0 0.0
      %525 = vmatpush1.msra.mxu0 %v263
      %526 = vmatprep.subr.mxu0 0.0
      %527 = vmatpush1.msra.mxu0 %v264
      %528 = vmatprep.subr.mxu0 0.0
      %529 = vmatpush1.msra.mxu0 %v265
      %530 = vmatprep.subr.mxu0 0.0
      %531 = vmatpush1.msra.mxu0 %v266
      %532 = vmatprep.subr.mxu0 0.0
      %533 = vmatpush1.msra.mxu0 %v267
      %534 = vmatprep.subr.mxu0 0.0
      %535 = vmatpush1.msra.mxu0 %v268
      %536 = vmatprep.subr.mxu0 0.0
      %537 = vmatpush1.msra.mxu0 %v269
      %538 = vmatprep.subr.mxu0 0.0
      %539 = vmatpush1.msra.mxu0 %v270
      %540 = vmatprep.subr.mxu0 0.0
      %541 = vmatpush1.msra.mxu0 %v271
      %542 = vmatprep.subr.mxu0 0.0
      %543 = vmatpush1.msra.mxu0 %v272
      %544 = vmatprep.subr.mxu0 0.0
      %545 = vmatpush1.msra.mxu0 %v273
      %546 = vmatprep.subr.mxu0 0.0
      %547 = vmatpush1.msra.mxu0 %v274
      %548 = vmatprep.subr.mxu0 0.0
      %549 = vmatpush1.msra.mxu0 %v275
      %550 = vmatprep.subr.mxu0 0.0
      %551 = vmatpush1.msra.mxu0 %v276
      %552 = vmatprep.subr.mxu0 0.0
      %553 = vmatpush1.msra.mxu0 0.0
      %554 = vmatprep.subr.mxu0 0.0
      %555 = vmatpush1.msra.mxu0 0.0
      %556 = vmatprep.subr.mxu0 0.0
      %557 = vmatpush1.msra.mxu0 0.0
      %558 = vmatprep.subr.mxu0 0.0
      %559 = vmatpush1.msra.mxu0 0.0
      %560 = vmatprep.subr.mxu0 0.0
      %561 = vmatpush1.msra.mxu0 0.0
      %562 = vmatprep.subr.mxu0 0.0
      %563 = vmatpush1.msra.mxu0 0.0
      %564 = vmatprep.subr.mxu0 0.0
      %565 = vmatpush1.msra.mxu0 0.0
      %566 = vmatprep.subr.mxu0 0.0
      %567 = vmatpush1.msra.mxu0 0.0
      %568 = vmatprep.subr.mxu0 0.0
      %569 = vmatpush1.msra.mxu0 0.0
      %570 = vmatprep.subr.mxu0 0.0
      %571 = vmatpush1.msra.mxu0 0.0
      %572 = vmatprep.subr.mxu0 0.0
      %573 = vmatpush1.msra.mxu0 0.0
      %574 = vmatprep.subr.mxu0 0.0
      %575 = vmatpush1.msra.mxu0 0.0
      %576 = vmatprep.subr.mxu0 0.0
      %577 = vmatpush1.msra.mxu0 0.0
      %578 = vmatprep.subr.mxu0 0.0
      %579 = vmatpush1.msra.mxu0 0.0
      %580 = vmatprep.subr.mxu0 0.0
      %581 = vmatpush1.msra.mxu0 0.0
      %582 = vmatprep.subr.mxu0 0.0
      %583 = vmatpush1.msra.mxu0 0.0
      %584 = vmatprep.mubr.f32.mxu0 0.0
      %585 = vmatmul.mubr.f32.gmra.mrb[0].mxu0 %v231
      %v586 = vpop.f32.mrb[0].mxu0
      %v587 = vadd.f32 %v442, %v586
      %v588 = vpop.f32.mrb[0].mxu0
      %589 = vmatprep.mubr.f32.mxu0 0.0
      %590 = vmatmul.mubr.f32.gmra.mrb[0].mxu0 %v232
      %v591 = vpop.f32.mrb[0].mxu0
      %v592 = vadd.f32 %v447, %v591
      %v593 = vpop.f32.mrb[0].mxu0
      %594 = vmatprep.mubr.f32.mxu0 0.0
      %595 = vmatmul.mubr.f32.gmra.mrb[0].mxu0 %v234
      %v596 = vpop.f32.mrb[0].mxu0
      %v597 = vadd.f32 %v452, %v596
      %v598 = vpop.f32.mrb[0].mxu0
      %599 = vmatprep.mubr.f32.mxu0 0.0
      %600 = vmatmul.mubr.f32.gmra.mrb[0].mxu0 %v235
      %v601 = vpop.f32.mrb[0].mxu0
      %v602 = vadd.f32 %v457, %v601
      %v603 = vpop.f32.mrb[0].mxu0
      %604 = vmatprep.mubr.f32.mxu0 0.0
      %605 = vmatmul.mubr.f32.gmra.mrb[0].mxu0 %v237
      %v606 = vpop.f32.mrb[0].mxu0
      %v607 = vadd.f32 %v462, %v606
      %v608 = vpop.f32.mrb[0].mxu0
      %609 = vmatprep.mubr.f32.mxu0 0.0
      %610 = vmatmul.mubr.f32.gmra.mrb[0].mxu0 %v238
      %v611 = vpop.f32.mrb[0].mxu0
      %v612 = vadd.f32 %v467, %v611
      %v613 = vpop.f32.mrb[0].mxu0
      %614 = vmatprep.mubr.f32.mxu0 0.0
      %615 = vmatmul.mubr.f32.gmra.mrb[0].mxu0 %v240
      %v616 = vpop.f32.mrb[0].mxu0
      %v617 = vadd.f32 %v472, %v616
      %v618 = vpop.f32.mrb[0].mxu0
      %619 = vmatprep.mubr.f32.mxu0 0.0
      %620 = vmatmul.mubr.f32.gmra.mrb[0].mxu0 %v241
      %v621 = vpop.f32.mrb[0].mxu0
      %v622 = vadd.f32 %v477, %v621
      %v623 = vpop.f32.mrb[0].mxu0
      %624 = vmatprep.mubr.f32.mxu0 0.0
      %625 = vmatmul.mubr.f32.gmra.mrb[0].mxu0 %v243
      %v626 = vpop.f32.mrb[0].mxu0
      %v627 = vadd.f32 %v482, %v626
      %v628 = vpop.f32.mrb[0].mxu0
      %629 = vmatprep.mubr.f32.mxu0 0.0
      %630 = vmatmul.mubr.f32.gmra.mrb[0].mxu0 %v244
      %v631 = vpop.f32.mrb[0].mxu0
      %v632 = vadd.f32 %v487, %v631
      %v633 = vpop.f32.mrb[0].mxu0
      %634 = vmatprep.mubr.f32.mxu0 0.0
      %635 = vmatmul.mubr.f32.gmra.mrb[0].mxu0 %v246
      %v636 = vpop.f32.mrb[0].mxu0
      %v637 = vadd.f32 %v492, %v636
      %v638 = vpop.f32.mrb[0].mxu0
      %639 = vmatprep.mubr.f32.mxu0 0.0
      %640 = vmatmul.mubr.f32.gmra.mrb[0].mxu0 %v247
      %v641 = vpop.f32.mrb[0].mxu0
      %v642 = vadd.f32 %v497, %v641
      %v643 = vpop.f32.mrb[0].mxu0
      %644 = vmatprep.mubr.f32.mxu0 0.0
      %645 = vmatmul.mubr.f32.gmra.mrb[0].mxu0 %v249
      %v646 = vpop.f32.mrb[0].mxu0
      %v647 = vadd.f32 %v502, %v646
      %v648 = vpop.f32.mrb[0].mxu0
      %649 = vmatprep.mubr.f32.mxu0 0.0
      %650 = vmatmul.mubr.f32.gmra.mrb[0].mxu0 %v250
      %v651 = vpop.f32.mrb[0].mxu0
      %v652 = vadd.f32 %v507, %v651
      %v653 = vpop.f32.mrb[0].mxu0
      %654 = vmatprep.mubr.f32.mxu0 0.0
      %655 = vmatmul.mubr.f32.gmra.mrb[0].mxu0 %v252
      %v656 = vpop.f32.mrb[0].mxu0
      %v657 = vadd.f32 %v512, %v656
      %v658 = vpop.f32.mrb[0].mxu0
      %659 = vmatprep.mubr.f32.mxu0 0.0
      %660 = vmatmul.mubr.f32.gmra.mrb[0].mxu0 %v253
      %v661 = vpop.f32.mrb[0].mxu0
      %v662 = vadd.f32 %v517, %v661
      %v663 = vpop.f32.mrb[0].mxu0
      %664 = vdwg.mxu0
      %vm665 = vcmask 1045504
      %v666 = vrot.slane %v231, 2
      %v667 = vrot.slane %v232, 2
      %v668 = vsel %vm665, %v666, %v667
      %v669 = vrot.slane %v233, 2
      %v670 = vsel %vm665, %v667, %v669
      %v671 = vrot.slane %v234, 2
      %v672 = vrot.slane %v235, 2
      %v673 = vsel %vm665, %v671, %v672
      %v674 = vrot.slane %v236, 2
      %v675 = vsel %vm665, %v672, %v674
      %v676 = vrot.slane %v237, 2
      %v677 = vrot.slane %v238, 2
      %v678 = vsel %vm665, %v676, %v677
      %v679 = vrot.slane %v239, 2
      %v680 = vsel %vm665, %v677, %v679
      %v681 = vrot.slane %v240, 2
      %v682 = vrot.slane %v241, 2
      %v683 = vsel %vm665, %v681, %v682
      %v684 = vrot.slane %v242, 2
      %v685 = vsel %vm665, %v682, %v684
      %v686 = vrot.slane %v243, 2
      %v687 = vrot.slane %v244, 2
      %v688 = vsel %vm665, %v686, %v687
      %v689 = vrot.slane %v245, 2
      %v690 = vsel %vm665, %v687, %v689
      %v691 = vrot.slane %v246, 2
      %v692 = vrot.slane %v247, 2
      %v693 = vsel %vm665, %v691, %v692
      %v694 = vrot.slane %v248, 2
      %v695 = vsel %vm665, %v692, %v694
      %v696 = vrot.slane %v249, 2
      %v697 = vrot.slane %v250, 2
      %v698 = vsel %vm665, %v696, %v697
      %v699 = vrot.slane %v251, 2
      %v700 = vsel %vm665, %v697, %v699
      %v701 = vrot.slane %v252, 2
      %v702 = vrot.slane %v253, 2
      %v703 = vsel %vm665, %v701, %v702
      %v704 = vrot.slane %v254, 2
      %v705 = vsel %vm665, %v702, %v704
      %s722 = scalar_lea.vmem %s1, 256
      %v723 = vld [vmem:[%s722] sm:$0xff]
      %v724 = vld [vmem:[%s722 + $0x8] sm:$0xff]
      %v725 = vld [vmem:[%s722 + $0x10] sm:$0xff]
      %v726 = vld [vmem:[%s722 + $0x18] sm:$0xff]
      %v727 = vld [vmem:[%s722 + $0x20] sm:$0xff]
      %v728 = vld [vmem:[%s722 + $0x28] sm:$0xff]
      %v729 = vld [vmem:[%s722 + $0x30] sm:$0xff]
      %v730 = vld [vmem:[%s722 + $0x38] sm:$0xff]
      %v731 = vld [vmem:[%s722 + $0x40] sm:$0xff]
      %v732 = vld [vmem:[%s722 + $0x48] sm:$0xff]
      %v733 = vld [vmem:[%s722 + $0x50] sm:$0xff]
      %v734 = vld [vmem:[%s722 + $0x58] sm:$0xff]
      %v735 = vld [vmem:[%s722 + $0x60] sm:$0xff]
      %v736 = vld [vmem:[%s722 + $0x68] sm:$0xff]
      %v737 = vld [vmem:[%s722 + $0x70] sm:$0xff]
      %v738 = vld [vmem:[%s722 + $0x78] sm:$0xff]
      %739 = vmatprep.subr.mxu0 0.0
      %740 = vmatpush1.msra.mxu0 %v723
      %741 = vmatprep.subr.mxu0 0.0
      %742 = vmatpush1.msra.mxu0 %v724
      %743 = vmatprep.subr.mxu0 0.0
      %744 = vmatpush1.msra.mxu0 %v725
      %745 = vmatprep.subr.mxu0 0.0
      %746 = vmatpush1.msra.mxu0 %v726
      %747 = vmatprep.subr.mxu0 0.0
      %748 = vmatpush1.msra.mxu0 %v727
      %749 = vmatprep.subr.mxu0 0.0
      %750 = vmatpush1.msra.mxu0 %v728
      %751 = vmatprep.subr.mxu0 0.0
      %752 = vmatpush1.msra.mxu0 %v729
      %753 = vmatprep.subr.mxu0 0.0
      %754 = vmatpush1.msra.mxu0 %v730
      %755 = vmatprep.subr.mxu0 0.0
      %756 = vmatpush1.msra.mxu0 %v731
      %757 = vmatprep.subr.mxu0 0.0
      %758 = vmatpush1.msra.mxu0 %v732
      %759 = vmatprep.subr.mxu0 0.0
      %760 = vmatpush1.msra.mxu0 %v733
      %761 = vmatprep.subr.mxu0 0.0
      %762 = vmatpush1.msra.mxu0 %v734
      %763 = vmatprep.subr.mxu0 0.0
      %764 = vmatpush1.msra.mxu0 %v735
      %765 = vmatprep.subr.mxu0 0.0
      %766 = vmatpush1.msra.mxu0 %v736
      %767 = vmatprep.subr.mxu0 0.0
      %768 = vmatpush1.msra.mxu0 %v737
      %769 = vmatprep.subr.mxu0 0.0
      %770 = vmatpush1.msra.mxu0 %v738
      %771 = vmatprep.subr.mxu0 0.0
      %772 = vmatpush1.msra.mxu0 0.0
      %773 = vmatprep.subr.mxu0 0.0
      %774 = vmatpush1.msra.mxu0 0.0
      %775 = vmatprep.subr.mxu0 0.0
      %776 = vmatpush1.msra.mxu0 0.0
      %777 = vmatprep.subr.mxu0 0.0
      %778 = vmatpush1.msra.mxu0 0.0
      %779 = vmatprep.subr.mxu0 0.0
      %780 = vmatpush1.msra.mxu0 0.0
      %781 = vmatprep.subr.mxu0 0.0
      %782 = vmatpush1.msra.mxu0 0.0
      %783 = vmatprep.subr.mxu0 0.0
      %784 = vmatpush1.msra.mxu0 0.0
      %785 = vmatprep.subr.mxu0 0.0
      %786 = vmatpush1.msra.mxu0 0.0
      %787 = vmatprep.subr.mxu0 0.0
      %788 = vmatpush1.msra.mxu0 0.0
      %789 = vmatprep.subr.mxu0 0.0
      %790 = vmatpush1.msra.mxu0 0.0
      %791 = vmatprep.subr.mxu0 0.0
      %792 = vmatpush1.msra.mxu0 0.0
      %793 = vmatprep.subr.mxu0 0.0
      %794 = vmatpush1.msra.mxu0 0.0
      %795 = vmatprep.subr.mxu0 0.0
      %796 = vmatpush1.msra.mxu0 0.0
      %797 = vmatprep.subr.mxu0 0.0
      %798 = vmatpush1.msra.mxu0 0.0
      %799 = vmatprep.subr.mxu0 0.0
      %800 = vmatpush1.msra.mxu0 0.0
      %801 = vmatprep.subr.mxu0 0.0
      %802 = vmatpush1.msra.mxu0 0.0
      %803 = vmatprep.mubr.f32.mxu0 0.0
      %804 = vmatmul.mubr.f32.gmra.mrb[0].mxu0 %v668
      %v805 = vpop.f32.mrb[0].mxu0
      %v806 = vadd.f32 0.0, %v805
      %v807 = vpop.f32.mrb[0].mxu0
      %808 = vmatprep.mubr.f32.mxu0 0.0
      %809 = vmatmul.mubr.f32.gmra.mrb[0].mxu0 %v670
      %v810 = vpop.f32.mrb[0].mxu0
      %v811 = vadd.f32 0.0, %v810
      %v812 = vpop.f32.mrb[0].mxu0
      %813 = vmatprep.mubr.f32.mxu0 0.0
      %814 = vmatmul.mubr.f32.gmra.mrb[0].mxu0 %v673
      %v815 = vpop.f32.mrb[0].mxu0
      %v816 = vadd.f32 0.0, %v815
      %v817 = vpop.f32.mrb[0].mxu0
      %818 = vmatprep.mubr.f32.mxu0 0.0
      %819 = vmatmul.mubr.f32.gmra.mrb[0].mxu0 %v675
      %v820 = vpop.f32.mrb[0].mxu0
      %v821 = vadd.f32 0.0, %v820
      %v822 = vpop.f32.mrb[0].mxu0
      %823 = vmatprep.mubr.f32.mxu0 0.0
      %824 = vmatmul.mubr.f32.gmra.mrb[0].mxu0 %v678
      %v825 = vpop.f32.mrb[0].mxu0
      %v826 = vadd.f32 0.0, %v825
      %v827 = vpop.f32.mrb[0].mxu0
      %828 = vmatprep.mubr.f32.mxu0 0.0
      %829 = vmatmul.mubr.f32.gmra.mrb[0].mxu0 %v680
      %v830 = vpop.f32.mrb[0].mxu0
      %v831 = vadd.f32 0.0, %v830
      %v832 = vpop.f32.mrb[0].mxu0
      %833 = vmatprep.mubr.f32.mxu0 0.0
      %834 = vmatmul.mubr.f32.gmra.mrb[0].mxu0 %v683
      %v835 = vpop.f32.mrb[0].mxu0
      %v836 = vadd.f32 0.0, %v835
      %v837 = vpop.f32.mrb[0].mxu0
      %838 = vmatprep.mubr.f32.mxu0 0.0
      %839 = vmatmul.mubr.f32.gmra.mrb[0].mxu0 %v685
      %v840 = vpop.f32.mrb[0].mxu0
      %v841 = vadd.f32 0.0, %v840
      %v842 = vpop.f32.mrb[0].mxu0
      %843 = vmatprep.mubr.f32.mxu0 0.0
      %844 = vmatmul.mubr.f32.gmra.mrb[0].mxu0 %v688
      %v845 = vpop.f32.mrb[0].mxu0
      %v846 = vadd.f32 0.0, %v845
      %v847 = vpop.f32.mrb[0].mxu0
      %848 = vmatprep.mubr.f32.mxu0 0.0
      %849 = vmatmul.mubr.f32.gmra.mrb[0].mxu0 %v690
      %v850 = vpop.f32.mrb[0].mxu0
      %v851 = vadd.f32 0.0, %v850
      %v852 = vpop.f32.mrb[0].mxu0
      %853 = vmatprep.mubr.f32.mxu0 0.0
      %854 = vmatmul.mubr.f32.gmra.mrb[0].mxu0 %v693
      %v855 = vpop.f32.mrb[0].mxu0
      %v856 = vadd.f32 0.0, %v855
      %v857 = vpop.f32.mrb[0].mxu0
      %858 = vmatprep.mubr.f32.mxu0 0.0
      %859 = vmatmul.mubr.f32.gmra.mrb[0].mxu0 %v695
      %v860 = vpop.f32.mrb[0].mxu0
      %v861 = vadd.f32 0.0, %v860
      %v862 = vpop.f32.mrb[0].mxu0
      %863 = vmatprep.mubr.f32.mxu0 0.0
      %864 = vmatmul.mubr.f32.gmra.mrb[0].mxu0 %v698
      %v865 = vpop.f32.mrb[0].mxu0
      %v866 = vadd.f32 0.0, %v865
      %v867 = vpop.f32.mrb[0].mxu0
      %868 = vmatprep.mubr.f32.mxu0 0.0
      %869 = vmatmul.mubr.f32.gmra.mrb[0].mxu0 %v700
      %v870 = vpop.f32.mrb[0].mxu0
      %v871 = vadd.f32 0.0, %v870
      %v872 = vpop.f32.mrb[0].mxu0
      %873 = vmatprep.mubr.f32.mxu0 0.0
      %874 = vmatmul.mubr.f32.gmra.mrb[0].mxu0 %v703
      %v875 = vpop.f32.mrb[0].mxu0
      %v876 = vadd.f32 0.0, %v875
      %v877 = vpop.f32.mrb[0].mxu0
      %878 = vmatprep.mubr.f32.mxu0 0.0
      %879 = vmatmul.mubr.f32.gmra.mrb[0].mxu0 %v705
      %v880 = vpop.f32.mrb[0].mxu0
      %v881 = vadd.f32 0.0, %v880
      %v882 = vpop.f32.mrb[0].mxu0
      %883 = vdwg.mxu0
      %v884 = vadd.f32 %v587, %v806
      %v885 = vadd.f32 %v592, %v811
      %v886 = vadd.f32 %v597, %v816
      %v887 = vadd.f32 %v602, %v821
      %v888 = vadd.f32 %v607, %v826
      %v889 = vadd.f32 %v612, %v831
      %v890 = vadd.f32 %v617, %v836
      %v891 = vadd.f32 %v622, %v841
      %v892 = vadd.f32 %v627, %v846
      %v893 = vadd.f32 %v632, %v851
      %v894 = vadd.f32 %v637, %v856
      %v895 = vadd.f32 %v642, %v861
      %v896 = vadd.f32 %v647, %v866
      %v897 = vadd.f32 %v652, %v871
      %v898 = vadd.f32 %v657, %v876
      %v899 = vadd.f32 %v662, %v881
      %s900 = scalar_lea.vmem %s1, 384
      %v901 = vld [vmem:[%s900] sm:$0xff]
      %v902 = vld [vmem:[%s900 + $0x8] sm:$0xff]
      %v903 = vld [vmem:[%s900 + $0x10] sm:$0xff]
      %v904 = vld [vmem:[%s900 + $0x18] sm:$0xff]
      %v905 = vld [vmem:[%s900 + $0x20] sm:$0xff]
      %v906 = vld [vmem:[%s900 + $0x28] sm:$0xff]
      %v907 = vld [vmem:[%s900 + $0x30] sm:$0xff]
      %v908 = vld [vmem:[%s900 + $0x38] sm:$0xff]
      %v909 = vld [vmem:[%s900 + $0x40] sm:$0xff]
      %v910 = vld [vmem:[%s900 + $0x48] sm:$0xff]
      %v911 = vld [vmem:[%s900 + $0x50] sm:$0xff]
      %v912 = vld [vmem:[%s900 + $0x58] sm:$0xff]
      %v913 = vld [vmem:[%s900 + $0x60] sm:$0xff]
      %v914 = vld [vmem:[%s900 + $0x68] sm:$0xff]
      %v915 = vld [vmem:[%s900 + $0x70] sm:$0xff]
      %v916 = vld [vmem:[%s900 + $0x78] sm:$0xff]
      %917 = vmatprep.subr.mxu0 0.0
      %918 = vmatpush1.msra.mxu0 %v901
      %919 = vmatprep.subr.mxu0 0.0
      %920 = vmatpush1.msra.mxu0 %v902
      %921 = vmatprep.subr.mxu0 0.0
      %922 = vmatpush1.msra.mxu0 %v903
      %923 = vmatprep.subr.mxu0 0.0
      %924 = vmatpush1.msra.mxu0 %v904
      %925 = vmatprep.subr.mxu0 0.0
      %926 = vmatpush1.msra.mxu0 %v905
      %927 = vmatprep.subr.mxu0 0.0
      %928 = vmatpush1.msra.mxu0 %v906
      %929 = vmatprep.subr.mxu0 0.0
      %930 = vmatpush1.msra.mxu0 %v907
      %931 = vmatprep.subr.mxu0 0.0
      %932 = vmatpush1.msra.mxu0 %v908
      %933 = vmatprep.subr.mxu0 0.0
      %934 = vmatpush1.msra.mxu0 %v909
      %935 = vmatprep.subr.mxu0 0.0
      %936 = vmatpush1.msra.mxu0 %v910
      %937 = vmatprep.subr.mxu0 0.0
      %938 = vmatpush1.msra.mxu0 %v911
      %939 = vmatprep.subr.mxu0 0.0
      %940 = vmatpush1.msra.mxu0 %v912
      %941 = vmatprep.subr.mxu0 0.0
      %942 = vmatpush1.msra.mxu0 %v913
      %943 = vmatprep.subr.mxu0 0.0
      %944 = vmatpush1.msra.mxu0 %v914
      %945 = vmatprep.subr.mxu0 0.0
      %946 = vmatpush1.msra.mxu0 %v915
      %947 = vmatprep.subr.mxu0 0.0
      %948 = vmatpush1.msra.mxu0 %v916
      %949 = vmatprep.subr.mxu0 0.0
      %950 = vmatpush1.msra.mxu0 0.0
      %951 = vmatprep.subr.mxu0 0.0
      %952 = vmatpush1.msra.mxu0 0.0
      %953 = vmatprep.subr.mxu0 0.0
      %954 = vmatpush1.msra.mxu0 0.0
      %955 = vmatprep.subr.mxu0 0.0
      %956 = vmatpush1.msra.mxu0 0.0
      %957 = vmatprep.subr.mxu0 0.0
      %958 = vmatpush1.msra.mxu0 0.0
      %959 = vmatprep.subr.mxu0 0.0
      %960 = vmatpush1.msra.mxu0 0.0
      %961 = vmatprep.subr.mxu0 0.0
      %962 = vmatpush1.msra.mxu0 0.0
      %963 = vmatprep.subr.mxu0 0.0
      %964 = vmatpush1.msra.mxu0 0.0
      %965 = vmatprep.subr.mxu0 0.0
      %966 = vmatpush1.msra.mxu0 0.0
      %967 = vmatprep.subr.mxu0 0.0
      %968 = vmatpush1.msra.mxu0 0.0
      %969 = vmatprep.subr.mxu0 0.0
      %970 = vmatpush1.msra.mxu0 0.0
      %971 = vmatprep.subr.mxu0 0.0
      %972 = vmatpush1.msra.mxu0 0.0
      %973 = vmatprep.subr.mxu0 0.0
      %974 = vmatpush1.msra.mxu0 0.0
      %975 = vmatprep.subr.mxu0 0.0
      %976 = vmatpush1.msra.mxu0 0.0
      %977 = vmatprep.subr.mxu0 0.0
      %978 = vmatpush1.msra.mxu0 0.0
      %979 = vmatprep.subr.mxu0 0.0
      %980 = vmatpush1.msra.mxu0 0.0
      %981 = vmatprep.mubr.f32.mxu0 0.0
      %982 = vmatmul.mubr.f32.gmra.mrb[0].mxu0 %v234
      %v983 = vpop.f32.mrb[0].mxu0
      %v984 = vadd.f32 0.0, %v983
      %v985 = vpop.f32.mrb[0].mxu0
      %986 = vmatprep.mubr.f32.mxu0 0.0
      %987 = vmatmul.mubr.f32.gmra.mrb[0].mxu0 %v235
      %v988 = vpop.f32.mrb[0].mxu0
      %v989 = vadd.f32 0.0, %v988
      %v990 = vpop.f32.mrb[0].mxu0
      %991 = vmatprep.mubr.f32.mxu0 0.0
      %992 = vmatmul.mubr.f32.gmra.mrb[0].mxu0 %v237
      %v993 = vpop.f32.mrb[0].mxu0
      %v994 = vadd.f32 0.0, %v993
      %v995 = vpop.f32.mrb[0].mxu0
      %996 = vmatprep.mubr.f32.mxu0 0.0
      %997 = vmatmul.mubr.f32.gmra.mrb[0].mxu0 %v238
      %v998 = vpop.f32.mrb[0].mxu0
      %v999 = vadd.f32 0.0, %v998
      %v1000 = vpop.f32.mrb[0].mxu0
      %1001 = vmatprep.mubr.f32.mxu0 0.0
      %1002 = vmatmul.mubr.f32.gmra.mrb[0].mxu0 %v240
      %v1003 = vpop.f32.mrb[0].mxu0
      %v1004 = vadd.f32 0.0, %v1003
      %v1005 = vpop.f32.mrb[0].mxu0
      %1006 = vmatprep.mubr.f32.mxu0 0.0
      %1007 = vmatmul.mubr.f32.gmra.mrb[0].mxu0 %v241
      %v1008 = vpop.f32.mrb[0].mxu0
      %v1009 = vadd.f32 0.0, %v1008
      %v1010 = vpop.f32.mrb[0].mxu0
      %1011 = vmatprep.mubr.f32.mxu0 0.0
      %1012 = vmatmul.mubr.f32.gmra.mrb[0].mxu0 %v243
      %v1013 = vpop.f32.mrb[0].mxu0
      %v1014 = vadd.f32 0.0, %v1013
      %v1015 = vpop.f32.mrb[0].mxu0
      %1016 = vmatprep.mubr.f32.mxu0 0.0
      %1017 = vmatmul.mubr.f32.gmra.mrb[0].mxu0 %v244
      %v1018 = vpop.f32.mrb[0].mxu0
      %v1019 = vadd.f32 0.0, %v1018
      %v1020 = vpop.f32.mrb[0].mxu0
      %1021 = vmatprep.mubr.f32.mxu0 0.0
      %1022 = vmatmul.mubr.f32.gmra.mrb[0].mxu0 %v246
      %v1023 = vpop.f32.mrb[0].mxu0
      %v1024 = vadd.f32 0.0, %v1023
      %v1025 = vpop.f32.mrb[0].mxu0
      %1026 = vmatprep.mubr.f32.mxu0 0.0
      %1027 = vmatmul.mubr.f32.gmra.mrb[0].mxu0 %v247
      %v1028 = vpop.f32.mrb[0].mxu0
      %v1029 = vadd.f32 0.0, %v1028
      %v1030 = vpop.f32.mrb[0].mxu0
      %1031 = vmatprep.mubr.f32.mxu0 0.0
      %1032 = vmatmul.mubr.f32.gmra.mrb[0].mxu0 %v249
      %v1033 = vpop.f32.mrb[0].mxu0
      %v1034 = vadd.f32 0.0, %v1033
      %v1035 = vpop.f32.mrb[0].mxu0
      %1036 = vmatprep.mubr.f32.mxu0 0.0
      %1037 = vmatmul.mubr.f32.gmra.mrb[0].mxu0 %v250
      %v1038 = vpop.f32.mrb[0].mxu0
      %v1039 = vadd.f32 0.0, %v1038
      %v1040 = vpop.f32.mrb[0].mxu0
      %1041 = vmatprep.mubr.f32.mxu0 0.0
      %1042 = vmatmul.mubr.f32.gmra.mrb[0].mxu0 %v252
      %v1043 = vpop.f32.mrb[0].mxu0
      %v1044 = vadd.f32 0.0, %v1043
      %v1045 = vpop.f32.mrb[0].mxu0
      %1046 = vmatprep.mubr.f32.mxu0 0.0
      %1047 = vmatmul.mubr.f32.gmra.mrb[0].mxu0 %v253
      %v1048 = vpop.f32.mrb[0].mxu0
      %v1049 = vadd.f32 0.0, %v1048
      %v1050 = vpop.f32.mrb[0].mxu0
      %1051 = vmatprep.mubr.f32.mxu0 0.0
      %1052 = vmatmul.mubr.f32.gmra.mrb[0].mxu0 %v255
      %v1053 = vpop.f32.mrb[0].mxu0
      %v1054 = vadd.f32 0.0, %v1053
      %v1055 = vpop.f32.mrb[0].mxu0
      %1056 = vmatprep.mubr.f32.mxu0 0.0
      %1057 = vmatmul.mubr.f32.gmra.mrb[0].mxu0 %v256
      %v1058 = vpop.f32.mrb[0].mxu0
      %v1059 = vadd.f32 0.0, %v1058
      %v1060 = vpop.f32.mrb[0].mxu0
      %1061 = vdwg.mxu0
      %v1062 = vadd.f32 %v884, %v984
      %v1063 = vadd.f32 %v885, %v989
      %v1064 = vadd.f32 %v886, %v994
      %v1065 = vadd.f32 %v887, %v999
      %v1066 = vadd.f32 %v888, %v1004
      %v1067 = vadd.f32 %v889, %v1009
      %v1068 = vadd.f32 %v890, %v1014
      %v1069 = vadd.f32 %v891, %v1019
      %v1070 = vadd.f32 %v892, %v1024
      %v1071 = vadd.f32 %v893, %v1029
      %v1072 = vadd.f32 %v894, %v1034
      %v1073 = vadd.f32 %v895, %v1039
      %v1074 = vadd.f32 %v896, %v1044
      %v1075 = vadd.f32 %v897, %v1049
      %v1076 = vadd.f32 %v898, %v1054
      %v1077 = vadd.f32 %v899, %v1059
      %v1081 = vrot.slane %v255, 1
      %v1082 = vrot.slane %v256, 1
      %v1083 = vsel %vm301, %v1081, %v1082
      %v1084 = vrot.slane %v257, 1
      %v1085 = vsel %vm301, %v1082, %v1084
      %s1088 = scalar_lea.vmem %s1, 512
      %v1089 = vld [vmem:[%s1088] sm:$0xff]
      %v1090 = vld [vmem:[%s1088 + $0x8] sm:$0xff]
      %v1091 = vld [vmem:[%s1088 + $0x10] sm:$0xff]
      %v1092 = vld [vmem:[%s1088 + $0x18] sm:$0xff]
      %v1093 = vld [vmem:[%s1088 + $0x20] sm:$0xff]
      %v1094 = vld [vmem:[%s1088 + $0x28] sm:$0xff]
      %v1095 = vld [vmem:[%s1088 + $0x30] sm:$0xff]
      %v1096 = vld [vmem:[%s1088 + $0x38] sm:$0xff]
      %v1097 = vld [vmem:[%s1088 + $0x40] sm:$0xff]
      %v1098 = vld [vmem:[%s1088 + $0x48] sm:$0xff]
      %v1099 = vld [vmem:[%s1088 + $0x50] sm:$0xff]
      %v1100 = vld [vmem:[%s1088 + $0x58] sm:$0xff]
      %v1101 = vld [vmem:[%s1088 + $0x60] sm:$0xff]
      %v1102 = vld [vmem:[%s1088 + $0x68] sm:$0xff]
      %v1103 = vld [vmem:[%s1088 + $0x70] sm:$0xff]
      %v1104 = vld [vmem:[%s1088 + $0x78] sm:$0xff]
      %1105 = vmatprep.subr.mxu0 0.0
      %1106 = vmatpush1.msra.mxu0 %v1089
      %1107 = vmatprep.subr.mxu0 0.0
      %1108 = vmatpush1.msra.mxu0 %v1090
      %1109 = vmatprep.subr.mxu0 0.0
      %1110 = vmatpush1.msra.mxu0 %v1091
      %1111 = vmatprep.subr.mxu0 0.0
      %1112 = vmatpush1.msra.mxu0 %v1092
      %1113 = vmatprep.subr.mxu0 0.0
      %1114 = vmatpush1.msra.mxu0 %v1093
      %1115 = vmatprep.subr.mxu0 0.0
      %1116 = vmatpush1.msra.mxu0 %v1094
      %1117 = vmatprep.subr.mxu0 0.0
      %1118 = vmatpush1.msra.mxu0 %v1095
      %1119 = vmatprep.subr.mxu0 0.0
      %1120 = vmatpush1.msra.mxu0 %v1096
      %1121 = vmatprep.subr.mxu0 0.0
      %1122 = vmatpush1.msra.mxu0 %v1097
      %1123 = vmatprep.subr.mxu0 0.0
      %1124 = vmatpush1.msra.mxu0 %v1098
      %1125 = vmatprep.subr.mxu0 0.0
      %1126 = vmatpush1.msra.mxu0 %v1099
      %1127 = vmatprep.subr.mxu0 0.0
      %1128 = vmatpush1.msra.mxu0 %v1100
      %1129 = vmatprep.subr.mxu0 0.0
      %1130 = vmatpush1.msra.mxu0 %v1101
      %1131 = vmatprep.subr.mxu0 0.0
      %1132 = vmatpush1.msra.mxu0 %v1102
      %1133 = vmatprep.subr.mxu0 0.0
      %1134 = vmatpush1.msra.mxu0 %v1103
      %1135 = vmatprep.subr.mxu0 0.0
      %1136 = vmatpush1.msra.mxu0 %v1104
      %1137 = vmatprep.subr.mxu0 0.0
      %1138 = vmatpush1.msra.mxu0 0.0
      %1139 = vmatprep.subr.mxu0 0.0
      %1140 = vmatpush1.msra.mxu0 0.0
      %1141 = vmatprep.subr.mxu0 0.0
      %1142 = vmatpush1.msra.mxu0 0.0
      %1143 = vmatprep.subr.mxu0 0.0
      %1144 = vmatpush1.msra.mxu0 0.0
      %1145 = vmatprep.subr.mxu0 0.0
      %1146 = vmatpush1.msra.mxu0 0.0
      %1147 = vmatprep.subr.mxu0 0.0
      %1148 = vmatpush1.msra.mxu0 0.0
      %1149 = vmatprep.subr.mxu0 0.0
      %1150 = vmatpush1.msra.mxu0 0.0
      %1151 = vmatprep.subr.mxu0 0.0
      %1152 = vmatpush1.msra.mxu0 0.0
      %1153 = vmatprep.subr.mxu0 0.0
      %1154 = vmatpush1.msra.mxu0 0.0
      %1155 = vmatprep.subr.mxu0 0.0
      %1156 = vmatpush1.msra.mxu0 0.0
      %1157 = vmatprep.subr.mxu0 0.0
      %1158 = vmatpush1.msra.mxu0 0.0
      %1159 = vmatprep.subr.mxu0 0.0
      %1160 = vmatpush1.msra.mxu0 0.0
      %1161 = vmatprep.subr.mxu0 0.0
      %1162 = vmatpush1.msra.mxu0 0.0
      %1163 = vmatprep.subr.mxu0 0.0
      %1164 = vmatpush1.msra.mxu0 0.0
      %1165 = vmatprep.subr.mxu0 0.0
      %1166 = vmatpush1.msra.mxu0 0.0
      %1167 = vmatprep.subr.mxu0 0.0
      %1168 = vmatpush1.msra.mxu0 0.0
      %1169 = vmatprep.mubr.f32.mxu0 0.0
      %1170 = vmatmul.mubr.f32.gmra.mrb[0].mxu0 %v309
      %v1171 = vpop.f32.mrb[0].mxu0
      %v1172 = vadd.f32 0.0, %v1171
      %v1173 = vpop.f32.mrb[0].mxu0
      %1174 = vmatprep.mubr.f32.mxu0 0.0
      %1175 = vmatmul.mubr.f32.gmra.mrb[0].mxu0 %v311
      %v1176 = vpop.f32.mrb[0].mxu0
      %v1177 = vadd.f32 0.0, %v1176
      %v1178 = vpop.f32.mrb[0].mxu0
      %1179 = vmatprep.mubr.f32.mxu0 0.0
      %1180 = vmatmul.mubr.f32.gmra.mrb[0].mxu0 %v314
      %v1181 = vpop.f32.mrb[0].mxu0
      %v1182 = vadd.f32 0.0, %v1181
      %v1183 = vpop.f32.mrb[0].mxu0
      %1184 = vmatprep.mubr.f32.mxu0 0.0
      %1185 = vmatmul.mubr.f32.gmra.mrb[0].mxu0 %v316
      %v1186 = vpop.f32.mrb[0].mxu0
      %v1187 = vadd.f32 0.0, %v1186
      %v1188 = vpop.f32.mrb[0].mxu0
      %1189 = vmatprep.mubr.f32.mxu0 0.0
      %1190 = vmatmul.mubr.f32.gmra.mrb[0].mxu0 %v319
      %v1191 = vpop.f32.mrb[0].mxu0
      %v1192 = vadd.f32 0.0, %v1191
      %v1193 = vpop.f32.mrb[0].mxu0
      %1194 = vmatprep.mubr.f32.mxu0 0.0
      %1195 = vmatmul.mubr.f32.gmra.mrb[0].mxu0 %v321
      %v1196 = vpop.f32.mrb[0].mxu0
      %v1197 = vadd.f32 0.0, %v1196
      %v1198 = vpop.f32.mrb[0].mxu0
      %1199 = vmatprep.mubr.f32.mxu0 0.0
      %1200 = vmatmul.mubr.f32.gmra.mrb[0].mxu0 %v324
      %v1201 = vpop.f32.mrb[0].mxu0
      %v1202 = vadd.f32 0.0, %v1201
      %v1203 = vpop.f32.mrb[0].mxu0
      %1204 = vmatprep.mubr.f32.mxu0 0.0
      %1205 = vmatmul.mubr.f32.gmra.mrb[0].mxu0 %v326
      %v1206 = vpop.f32.mrb[0].mxu0
      %v1207 = vadd.f32 0.0, %v1206
      %v1208 = vpop.f32.mrb[0].mxu0
      %1209 = vmatprep.mubr.f32.mxu0 0.0
      %1210 = vmatmul.mubr.f32.gmra.mrb[0].mxu0 %v329
      %v1211 = vpop.f32.mrb[0].mxu0
      %v1212 = vadd.f32 0.0, %v1211
      %v1213 = vpop.f32.mrb[0].mxu0
      %1214 = vmatprep.mubr.f32.mxu0 0.0
      %1215 = vmatmul.mubr.f32.gmra.mrb[0].mxu0 %v331
      %v1216 = vpop.f32.mrb[0].mxu0
      %v1217 = vadd.f32 0.0, %v1216
      %v1218 = vpop.f32.mrb[0].mxu0
      %1219 = vmatprep.mubr.f32.mxu0 0.0
      %1220 = vmatmul.mubr.f32.gmra.mrb[0].mxu0 %v334
      %v1221 = vpop.f32.mrb[0].mxu0
      %v1222 = vadd.f32 0.0, %v1221
      %v1223 = vpop.f32.mrb[0].mxu0
      %1224 = vmatprep.mubr.f32.mxu0 0.0
      %1225 = vmatmul.mubr.f32.gmra.mrb[0].mxu0 %v336
      %v1226 = vpop.f32.mrb[0].mxu0
      %v1227 = vadd.f32 0.0, %v1226
      %v1228 = vpop.f32.mrb[0].mxu0
      %1229 = vmatprep.mubr.f32.mxu0 0.0
      %1230 = vmatmul.mubr.f32.gmra.mrb[0].mxu0 %v339
      %v1231 = vpop.f32.mrb[0].mxu0
      %v1232 = vadd.f32 0.0, %v1231
      %v1233 = vpop.f32.mrb[0].mxu0
      %1234 = vmatprep.mubr.f32.mxu0 0.0
      %1235 = vmatmul.mubr.f32.gmra.mrb[0].mxu0 %v341
      %v1236 = vpop.f32.mrb[0].mxu0
      %v1237 = vadd.f32 0.0, %v1236
      %v1238 = vpop.f32.mrb[0].mxu0
      %1239 = vmatprep.mubr.f32.mxu0 0.0
      %1240 = vmatmul.mubr.f32.gmra.mrb[0].mxu0 %v1083
      %v1241 = vpop.f32.mrb[0].mxu0
      %v1242 = vadd.f32 0.0, %v1241
      %v1243 = vpop.f32.mrb[0].mxu0
      %1244 = vmatprep.mubr.f32.mxu0 0.0
      %1245 = vmatmul.mubr.f32.gmra.mrb[0].mxu0 %v1085
      %v1246 = vpop.f32.mrb[0].mxu0
      %v1247 = vadd.f32 0.0, %v1246
      %v1248 = vpop.f32.mrb[0].mxu0
      %1249 = vdwg.mxu0
      %v1250 = vadd.f32 %v1062, %v1172
      %v1251 = vadd.f32 %v1063, %v1177
      %v1252 = vadd.f32 %v1064, %v1182
      %v1253 = vadd.f32 %v1065, %v1187
      %v1254 = vadd.f32 %v1066, %v1192
      %v1255 = vadd.f32 %v1067, %v1197
      %v1256 = vadd.f32 %v1068, %v1202
      %v1257 = vadd.f32 %v1069, %v1207
      %v1258 = vadd.f32 %v1070, %v1212
      %v1259 = vadd.f32 %v1071, %v1217
      %v1260 = vadd.f32 %v1072, %v1222
      %v1261 = vadd.f32 %v1073, %v1227
      %v1262 = vadd.f32 %v1074, %v1232
      %v1263 = vadd.f32 %v1075, %v1237
      %v1264 = vadd.f32 %v1076, %v1242
      %v1265 = vadd.f32 %v1077, %v1247
      %v1266 = vrot.slane %v255, 2
      %v1267 = vrot.slane %v256, 2
      %v1268 = vsel %vm665, %v1266, %v1267
      %v1269 = vrot.slane %v257, 2
      %v1270 = vsel %vm665, %v1267, %v1269
      %s1273 = scalar_lea.vmem %s1, 640
      %v1274 = vld [vmem:[%s1273] sm:$0xff]
      %v1275 = vld [vmem:[%s1273 + $0x8] sm:$0xff]
      %v1276 = vld [vmem:[%s1273 + $0x10] sm:$0xff]
      %v1277 = vld [vmem:[%s1273 + $0x18] sm:$0xff]
      %v1278 = vld [vmem:[%s1273 + $0x20] sm:$0xff]
      %v1279 = vld [vmem:[%s1273 + $0x28] sm:$0xff]
      %v1280 = vld [vmem:[%s1273 + $0x30] sm:$0xff]
      %v1281 = vld [vmem:[%s1273 + $0x38] sm:$0xff]
      %v1282 = vld [vmem:[%s1273 + $0x40] sm:$0xff]
      %v1283 = vld [vmem:[%s1273 + $0x48] sm:$0xff]
      %v1284 = vld [vmem:[%s1273 + $0x50] sm:$0xff]
      %v1285 = vld [vmem:[%s1273 + $0x58] sm:$0xff]
      %v1286 = vld [vmem:[%s1273 + $0x60] sm:$0xff]
      %v1287 = vld [vmem:[%s1273 + $0x68] sm:$0xff]
      %v1288 = vld [vmem:[%s1273 + $0x70] sm:$0xff]
      %v1289 = vld [vmem:[%s1273 + $0x78] sm:$0xff]
      %1290 = vmatprep.subr.mxu0 0.0
      %1291 = vmatpush1.msra.mxu0 %v1274
      %1292 = vmatprep.subr.mxu0 0.0
      %1293 = vmatpush1.msra.mxu0 %v1275
      %1294 = vmatprep.subr.mxu0 0.0
      %1295 = vmatpush1.msra.mxu0 %v1276
      %1296 = vmatprep.subr.mxu0 0.0
      %1297 = vmatpush1.msra.mxu0 %v1277
      %1298 = vmatprep.subr.mxu0 0.0
      %1299 = vmatpush1.msra.mxu0 %v1278
      %1300 = vmatprep.subr.mxu0 0.0
      %1301 = vmatpush1.msra.mxu0 %v1279
      %1302 = vmatprep.subr.mxu0 0.0
      %1303 = vmatpush1.msra.mxu0 %v1280
      %1304 = vmatprep.subr.mxu0 0.0
      %1305 = vmatpush1.msra.mxu0 %v1281
      %1306 = vmatprep.subr.mxu0 0.0
      %1307 = vmatpush1.msra.mxu0 %v1282
      %1308 = vmatprep.subr.mxu0 0.0
      %1309 = vmatpush1.msra.mxu0 %v1283
      %1310 = vmatprep.subr.mxu0 0.0
      %1311 = vmatpush1.msra.mxu0 %v1284
      %1312 = vmatprep.subr.mxu0 0.0
      %1313 = vmatpush1.msra.mxu0 %v1285
      %1314 = vmatprep.subr.mxu0 0.0
      %1315 = vmatpush1.msra.mxu0 %v1286
      %1316 = vmatprep.subr.mxu0 0.0
      %1317 = vmatpush1.msra.mxu0 %v1287
      %1318 = vmatprep.subr.mxu0 0.0
      %1319 = vmatpush1.msra.mxu0 %v1288
      %1320 = vmatprep.subr.mxu0 0.0
      %1321 = vmatpush1.msra.mxu0 %v1289
      %1322 = vmatprep.subr.mxu0 0.0
      %1323 = vmatpush1.msra.mxu0 0.0
      %1324 = vmatprep.subr.mxu0 0.0
      %1325 = vmatpush1.msra.mxu0 0.0
      %1326 = vmatprep.subr.mxu0 0.0
      %1327 = vmatpush1.msra.mxu0 0.0
      %1328 = vmatprep.subr.mxu0 0.0
      %1329 = vmatpush1.msra.mxu0 0.0
      %1330 = vmatprep.subr.mxu0 0.0
      %1331 = vmatpush1.msra.mxu0 0.0
      %1332 = vmatprep.subr.mxu0 0.0
      %1333 = vmatpush1.msra.mxu0 0.0
      %1334 = vmatprep.subr.mxu0 0.0
      %1335 = vmatpush1.msra.mxu0 0.0
      %1336 = vmatprep.subr.mxu0 0.0
      %1337 = vmatpush1.msra.mxu0 0.0
      %1338 = vmatprep.subr.mxu0 0.0
      %1339 = vmatpush1.msra.mxu0 0.0
      %1340 = vmatprep.subr.mxu0 0.0
      %1341 = vmatpush1.msra.mxu0 0.0
      %1342 = vmatprep.subr.mxu0 0.0
      %1343 = vmatpush1.msra.mxu0 0.0
      %1344 = vmatprep.subr.mxu0 0.0
      %1345 = vmatpush1.msra.mxu0 0.0
      %1346 = vmatprep.subr.mxu0 0.0
      %1347 = vmatpush1.msra.mxu0 0.0
      %1348 = vmatprep.subr.mxu0 0.0
      %1349 = vmatpush1.msra.mxu0 0.0
      %1350 = vmatprep.subr.mxu0 0.0
      %1351 = vmatpush1.msra.mxu0 0.0
      %1352 = vmatprep.subr.mxu0 0.0
      %1353 = vmatpush1.msra.mxu0 0.0
      %1354 = vmatprep.mubr.f32.mxu0 0.0
      %1355 = vmatmul.mubr.f32.gmra.mrb[0].mxu0 %v673
      %v1356 = vpop.f32.mrb[0].mxu0
      %v1357 = vadd.f32 0.0, %v1356
      %v1358 = vpop.f32.mrb[0].mxu0
      %1359 = vmatprep.mubr.f32.mxu0 0.0
      %1360 = vmatmul.mubr.f32.gmra.mrb[0].mxu0 %v675
      %v1361 = vpop.f32.mrb[0].mxu0
      %v1362 = vadd.f32 0.0, %v1361
      %v1363 = vpop.f32.mrb[0].mxu0
      %1364 = vmatprep.mubr.f32.mxu0 0.0
      %1365 = vmatmul.mubr.f32.gmra.mrb[0].mxu0 %v678
      %v1366 = vpop.f32.mrb[0].mxu0
      %v1367 = vadd.f32 0.0, %v1366
      %v1368 = vpop.f32.mrb[0].mxu0
      %1369 = vmatprep.mubr.f32.mxu0 0.0
      %1370 = vmatmul.mubr.f32.gmra.mrb[0].mxu0 %v680
      %v1371 = vpop.f32.mrb[0].mxu0
      %v1372 = vadd.f32 0.0, %v1371
      %v1373 = vpop.f32.mrb[0].mxu0
      %1374 = vmatprep.mubr.f32.mxu0 0.0
      %1375 = vmatmul.mubr.f32.gmra.mrb[0].mxu0 %v683
      %v1376 = vpop.f32.mrb[0].mxu0
      %v1377 = vadd.f32 0.0, %v1376
      %v1378 = vpop.f32.mrb[0].mxu0
      %1379 = vmatprep.mubr.f32.mxu0 0.0
      %1380 = vmatmul.mubr.f32.gmra.mrb[0].mxu0 %v685
      %v1381 = vpop.f32.mrb[0].mxu0
      %v1382 = vadd.f32 0.0, %v1381
      %v1383 = vpop.f32.mrb[0].mxu0
      %1384 = vmatprep.mubr.f32.mxu0 0.0
      %1385 = vmatmul.mubr.f32.gmra.mrb[0].mxu0 %v688
      %v1386 = vpop.f32.mrb[0].mxu0
      %v1387 = vadd.f32 0.0, %v1386
      %v1388 = vpop.f32.mrb[0].mxu0
      %1389 = vmatprep.mubr.f32.mxu0 0.0
      %1390 = vmatmul.mubr.f32.gmra.mrb[0].mxu0 %v690
      %v1391 = vpop.f32.mrb[0].mxu0
      %v1392 = vadd.f32 0.0, %v1391
      %v1393 = vpop.f32.mrb[0].mxu0
      %1394 = vmatprep.mubr.f32.mxu0 0.0
      %1395 = vmatmul.mubr.f32.gmra.mrb[0].mxu0 %v693
      %v1396 = vpop.f32.mrb[0].mxu0
      %v1397 = vadd.f32 0.0, %v1396
      %v1398 = vpop.f32.mrb[0].mxu0
      %1399 = vmatprep.mubr.f32.mxu0 0.0
      %1400 = vmatmul.mubr.f32.gmra.mrb[0].mxu0 %v695
      %v1401 = vpop.f32.mrb[0].mxu0
      %v1402 = vadd.f32 0.0, %v1401
      %v1403 = vpop.f32.mrb[0].mxu0
      %1404 = vmatprep.mubr.f32.mxu0 0.0
      %1405 = vmatmul.mubr.f32.gmra.mrb[0].mxu0 %v698
      %v1406 = vpop.f32.mrb[0].mxu0
      %v1407 = vadd.f32 0.0, %v1406
      %v1408 = vpop.f32.mrb[0].mxu0
      %1409 = vmatprep.mubr.f32.mxu0 0.0
      %1410 = vmatmul.mubr.f32.gmra.mrb[0].mxu0 %v700
      %v1411 = vpop.f32.mrb[0].mxu0
      %v1412 = vadd.f32 0.0, %v1411
      %v1413 = vpop.f32.mrb[0].mxu0
      %1414 = vmatprep.mubr.f32.mxu0 0.0
      %1415 = vmatmul.mubr.f32.gmra.mrb[0].mxu0 %v703
      %v1416 = vpop.f32.mrb[0].mxu0
      %v1417 = vadd.f32 0.0, %v1416
      %v1418 = vpop.f32.mrb[0].mxu0
      %1419 = vmatprep.mubr.f32.mxu0 0.0
      %1420 = vmatmul.mubr.f32.gmra.mrb[0].mxu0 %v705
      %v1421 = vpop.f32.mrb[0].mxu0
      %v1422 = vadd.f32 0.0, %v1421
      %v1423 = vpop.f32.mrb[0].mxu0
      %1424 = vmatprep.mubr.f32.mxu0 0.0
      %1425 = vmatmul.mubr.f32.gmra.mrb[0].mxu0 %v1268
      %v1426 = vpop.f32.mrb[0].mxu0
      %v1427 = vadd.f32 0.0, %v1426
      %v1428 = vpop.f32.mrb[0].mxu0
      %1429 = vmatprep.mubr.f32.mxu0 0.0
      %1430 = vmatmul.mubr.f32.gmra.mrb[0].mxu0 %v1270
      %v1431 = vpop.f32.mrb[0].mxu0
      %v1432 = vadd.f32 0.0, %v1431
      %v1433 = vpop.f32.mrb[0].mxu0
      %1434 = vdwg.mxu0
      %v1435 = vadd.f32 %v1250, %v1357
      %v1436 = vadd.f32 %v1251, %v1362
      %v1437 = vadd.f32 %v1252, %v1367
      %v1438 = vadd.f32 %v1253, %v1372
      %v1439 = vadd.f32 %v1254, %v1377
      %v1440 = vadd.f32 %v1255, %v1382
      %v1441 = vadd.f32 %v1256, %v1387
      %v1442 = vadd.f32 %v1257, %v1392
      %v1443 = vadd.f32 %v1258, %v1397
      %v1444 = vadd.f32 %v1259, %v1402
      %v1445 = vadd.f32 %v1260, %v1407
      %v1446 = vadd.f32 %v1261, %v1412
      %v1447 = vadd.f32 %v1262, %v1417
      %v1448 = vadd.f32 %v1263, %v1422
      %v1449 = vadd.f32 %v1264, %v1427
      %v1450 = vadd.f32 %v1265, %v1432
      %s1451 = scalar_lea.vmem %s1, 768
      %v1452 = vld [vmem:[%s1451] sm:$0xff]
      %v1453 = vld [vmem:[%s1451 + $0x8] sm:$0xff]
      %v1454 = vld [vmem:[%s1451 + $0x10] sm:$0xff]
      %v1455 = vld [vmem:[%s1451 + $0x18] sm:$0xff]
      %v1456 = vld [vmem:[%s1451 + $0x20] sm:$0xff]
      %v1457 = vld [vmem:[%s1451 + $0x28] sm:$0xff]
      %v1458 = vld [vmem:[%s1451 + $0x30] sm:$0xff]
      %v1459 = vld [vmem:[%s1451 + $0x38] sm:$0xff]
      %v1460 = vld [vmem:[%s1451 + $0x40] sm:$0xff]
      %v1461 = vld [vmem:[%s1451 + $0x48] sm:$0xff]
      %v1462 = vld [vmem:[%s1451 + $0x50] sm:$0xff]
      %v1463 = vld [vmem:[%s1451 + $0x58] sm:$0xff]
      %v1464 = vld [vmem:[%s1451 + $0x60] sm:$0xff]
      %v1465 = vld [vmem:[%s1451 + $0x68] sm:$0xff]
      %v1466 = vld [vmem:[%s1451 + $0x70] sm:$0xff]
      %v1467 = vld [vmem:[%s1451 + $0x78] sm:$0xff]
      %1468 = vmatprep.subr.mxu0 0.0
      %1469 = vmatpush1.msra.mxu0 %v1452
      %1470 = vmatprep.subr.mxu0 0.0
      %1471 = vmatpush1.msra.mxu0 %v1453
      %1472 = vmatprep.subr.mxu0 0.0
      %1473 = vmatpush1.msra.mxu0 %v1454
      %1474 = vmatprep.subr.mxu0 0.0
      %1475 = vmatpush1.msra.mxu0 %v1455
      %1476 = vmatprep.subr.mxu0 0.0
      %1477 = vmatpush1.msra.mxu0 %v1456
      %1478 = vmatprep.subr.mxu0 0.0
      %1479 = vmatpush1.msra.mxu0 %v1457
      %1480 = vmatprep.subr.mxu0 0.0
      %1481 = vmatpush1.msra.mxu0 %v1458
      %1482 = vmatprep.subr.mxu0 0.0
      %1483 = vmatpush1.msra.mxu0 %v1459
      %1484 = vmatprep.subr.mxu0 0.0
      %1485 = vmatpush1.msra.mxu0 %v1460
      %1486 = vmatprep.subr.mxu0 0.0
      %1487 = vmatpush1.msra.mxu0 %v1461
      %1488 = vmatprep.subr.mxu0 0.0
      %1489 = vmatpush1.msra.mxu0 %v1462
      %1490 = vmatprep.subr.mxu0 0.0
      %1491 = vmatpush1.msra.mxu0 %v1463
      %1492 = vmatprep.subr.mxu0 0.0
      %1493 = vmatpush1.msra.mxu0 %v1464
      %1494 = vmatprep.subr.mxu0 0.0
      %1495 = vmatpush1.msra.mxu0 %v1465
      %1496 = vmatprep.subr.mxu0 0.0
      %1497 = vmatpush1.msra.mxu0 %v1466
      %1498 = vmatprep.subr.mxu0 0.0
      %1499 = vmatpush1.msra.mxu0 %v1467
      %1500 = vmatprep.subr.mxu0 0.0
      %1501 = vmatpush1.msra.mxu0 0.0
      %1502 = vmatprep.subr.mxu0 0.0
      %1503 = vmatpush1.msra.mxu0 0.0
      %1504 = vmatprep.subr.mxu0 0.0
      %1505 = vmatpush1.msra.mxu0 0.0
      %1506 = vmatprep.subr.mxu0 0.0
      %1507 = vmatpush1.msra.mxu0 0.0
      %1508 = vmatprep.subr.mxu0 0.0
      %1509 = vmatpush1.msra.mxu0 0.0
      %1510 = vmatprep.subr.mxu0 0.0
      %1511 = vmatpush1.msra.mxu0 0.0
      %1512 = vmatprep.subr.mxu0 0.0
      %1513 = vmatpush1.msra.mxu0 0.0
      %1514 = vmatprep.subr.mxu0 0.0
      %1515 = vmatpush1.msra.mxu0 0.0
      %1516 = vmatprep.subr.mxu0 0.0
      %1517 = vmatpush1.msra.mxu0 0.0
      %1518 = vmatprep.subr.mxu0 0.0
      %1519 = vmatpush1.msra.mxu0 0.0
      %1520 = vmatprep.subr.mxu0 0.0
      %1521 = vmatpush1.msra.mxu0 0.0
      %1522 = vmatprep.subr.mxu0 0.0
      %1523 = vmatpush1.msra.mxu0 0.0
      %1524 = vmatprep.subr.mxu0 0.0
      %1525 = vmatpush1.msra.mxu0 0.0
      %1526 = vmatprep.subr.mxu0 0.0
      %1527 = vmatpush1.msra.mxu0 0.0
      %1528 = vmatprep.subr.mxu0 0.0
      %1529 = vmatpush1.msra.mxu0 0.0
      %1530 = vmatprep.subr.mxu0 0.0
      %1531 = vmatpush1.msra.mxu0 0.0
      %1532 = vmatprep.mubr.f32.mxu0 0.0
      %1533 = vmatmul.mubr.f32.gmra.mrb[0].mxu0 %v237
      %v1534 = vpop.f32.mrb[0].mxu0
      %v1535 = vadd.f32 0.0, %v1534
      %v1536 = vpop.f32.mrb[0].mxu0
      %1537 = vmatprep.mubr.f32.mxu0 0.0
      %1538 = vmatmul.mubr.f32.gmra.mrb[0].mxu0 %v238
      %v1539 = vpop.f32.mrb[0].mxu0
      %v1540 = vadd.f32 0.0, %v1539
      %v1541 = vpop.f32.mrb[0].mxu0
      %1542 = vmatprep.mubr.f32.mxu0 0.0
      %1543 = vmatmul.mubr.f32.gmra.mrb[0].mxu0 %v240
      %v1544 = vpop.f32.mrb[0].mxu0
      %v1545 = vadd.f32 0.0, %v1544
      %v1546 = vpop.f32.mrb[0].mxu0
      %1547 = vmatprep.mubr.f32.mxu0 0.0
      %1548 = vmatmul.mubr.f32.gmra.mrb[0].mxu0 %v241
      %v1549 = vpop.f32.mrb[0].mxu0
      %v1550 = vadd.f32 0.0, %v1549
      %v1551 = vpop.f32.mrb[0].mxu0
      %1552 = vmatprep.mubr.f32.mxu0 0.0
      %1553 = vmatmul.mubr.f32.gmra.mrb[0].mxu0 %v243
      %v1554 = vpop.f32.mrb[0].mxu0
      %v1555 = vadd.f32 0.0, %v1554
      %v1556 = vpop.f32.mrb[0].mxu0
      %1557 = vmatprep.mubr.f32.mxu0 0.0
      %1558 = vmatmul.mubr.f32.gmra.mrb[0].mxu0 %v244
      %v1559 = vpop.f32.mrb[0].mxu0
      %v1560 = vadd.f32 0.0, %v1559
      %v1561 = vpop.f32.mrb[0].mxu0
      %1562 = vmatprep.mubr.f32.mxu0 0.0
      %1563 = vmatmul.mubr.f32.gmra.mrb[0].mxu0 %v246
      %v1564 = vpop.f32.mrb[0].mxu0
      %v1565 = vadd.f32 0.0, %v1564
      %v1566 = vpop.f32.mrb[0].mxu0
      %1567 = vmatprep.mubr.f32.mxu0 0.0
      %1568 = vmatmul.mubr.f32.gmra.mrb[0].mxu0 %v247
      %v1569 = vpop.f32.mrb[0].mxu0
      %v1570 = vadd.f32 0.0, %v1569
      %v1571 = vpop.f32.mrb[0].mxu0
      %1572 = vmatprep.mubr.f32.mxu0 0.0
      %1573 = vmatmul.mubr.f32.gmra.mrb[0].mxu0 %v249
      %v1574 = vpop.f32.mrb[0].mxu0
      %v1575 = vadd.f32 0.0, %v1574
      %v1576 = vpop.f32.mrb[0].mxu0
      %1577 = vmatprep.mubr.f32.mxu0 0.0
      %1578 = vmatmul.mubr.f32.gmra.mrb[0].mxu0 %v250
      %v1579 = vpop.f32.mrb[0].mxu0
      %v1580 = vadd.f32 0.0, %v1579
      %v1581 = vpop.f32.mrb[0].mxu0
      %1582 = vmatprep.mubr.f32.mxu0 0.0
      %1583 = vmatmul.mubr.f32.gmra.mrb[0].mxu0 %v252
      %v1584 = vpop.f32.mrb[0].mxu0
      %v1585 = vadd.f32 0.0, %v1584
      %v1586 = vpop.f32.mrb[0].mxu0
      %1587 = vmatprep.mubr.f32.mxu0 0.0
      %1588 = vmatmul.mubr.f32.gmra.mrb[0].mxu0 %v253
      %v1589 = vpop.f32.mrb[0].mxu0
      %v1590 = vadd.f32 0.0, %v1589
      %v1591 = vpop.f32.mrb[0].mxu0
      %1592 = vmatprep.mubr.f32.mxu0 0.0
      %1593 = vmatmul.mubr.f32.gmra.mrb[0].mxu0 %v255
      %v1594 = vpop.f32.mrb[0].mxu0
      %v1595 = vadd.f32 0.0, %v1594
      %v1596 = vpop.f32.mrb[0].mxu0
      %1597 = vmatprep.mubr.f32.mxu0 0.0
      %1598 = vmatmul.mubr.f32.gmra.mrb[0].mxu0 %v256
      %v1599 = vpop.f32.mrb[0].mxu0
      %v1600 = vadd.f32 0.0, %v1599
      %v1601 = vpop.f32.mrb[0].mxu0
      %1602 = vmatprep.mubr.f32.mxu0 0.0
      %1603 = vmatmul.mubr.f32.gmra.mrb[0].mxu0 %v258
      %v1604 = vpop.f32.mrb[0].mxu0
      %v1605 = vadd.f32 0.0, %v1604
      %v1606 = vpop.f32.mrb[0].mxu0
      %1607 = vmatprep.mubr.f32.mxu0 0.0
      %1608 = vmatmul.mubr.f32.gmra.mrb[0].mxu0 %v259
      %v1609 = vpop.f32.mrb[0].mxu0
      %v1610 = vadd.f32 0.0, %v1609
      %v1611 = vpop.f32.mrb[0].mxu0
      %1612 = vdwg.mxu0
      %v1613 = vadd.f32 %v1435, %v1535
      %v1614 = vadd.f32 %v1436, %v1540
      %v1615 = vadd.f32 %v1437, %v1545
      %v1616 = vadd.f32 %v1438, %v1550
      %v1617 = vadd.f32 %v1439, %v1555
      %v1618 = vadd.f32 %v1440, %v1560
      %v1619 = vadd.f32 %v1441, %v1565
      %v1620 = vadd.f32 %v1442, %v1570
      %v1621 = vadd.f32 %v1443, %v1575
      %v1622 = vadd.f32 %v1444, %v1580
      %v1623 = vadd.f32 %v1445, %v1585
      %v1624 = vadd.f32 %v1446, %v1590
      %v1625 = vadd.f32 %v1447, %v1595
      %v1626 = vadd.f32 %v1448, %v1600
      %v1627 = vadd.f32 %v1449, %v1605
      %v1628 = vadd.f32 %v1450, %v1610
      %v1632 = vrot.slane %v258, 1
      %v1633 = vrot.slane %v259, 1
      %v1634 = vsel %vm301, %v1632, %v1633
      %v1635 = vrot.slane %v260, 1
      %v1636 = vsel %vm301, %v1633, %v1635
      %s1639 = scalar_lea.vmem %s1, 896
      %v1640 = vld [vmem:[%s1639] sm:$0xff]
      %v1641 = vld [vmem:[%s1639 + $0x8] sm:$0xff]
      %v1642 = vld [vmem:[%s1639 + $0x10] sm:$0xff]
      %v1643 = vld [vmem:[%s1639 + $0x18] sm:$0xff]
      %v1644 = vld [vmem:[%s1639 + $0x20] sm:$0xff]
      %v1645 = vld [vmem:[%s1639 + $0x28] sm:$0xff]
      %v1646 = vld [vmem:[%s1639 + $0x30] sm:$0xff]
      %v1647 = vld [vmem:[%s1639 + $0x38] sm:$0xff]
      %v1648 = vld [vmem:[%s1639 + $0x40] sm:$0xff]
      %v1649 = vld [vmem:[%s1639 + $0x48] sm:$0xff]
      %v1650 = vld [vmem:[%s1639 + $0x50] sm:$0xff]
      %v1651 = vld [vmem:[%s1639 + $0x58] sm:$0xff]
      %v1652 = vld [vmem:[%s1639 + $0x60] sm:$0xff]
      %v1653 = vld [vmem:[%s1639 + $0x68] sm:$0xff]
      %v1654 = vld [vmem:[%s1639 + $0x70] sm:$0xff]
      %v1655 = vld [vmem:[%s1639 + $0x78] sm:$0xff]
      %1656 = vmatprep.subr.mxu0 0.0
      %1657 = vmatpush1.msra.mxu0 %v1640
      %1658 = vmatprep.subr.mxu0 0.0
      %1659 = vmatpush1.msra.mxu0 %v1641
      %1660 = vmatprep.subr.mxu0 0.0
      %1661 = vmatpush1.msra.mxu0 %v1642
      %1662 = vmatprep.subr.mxu0 0.0
      %1663 = vmatpush1.msra.mxu0 %v1643
      %1664 = vmatprep.subr.mxu0 0.0
      %1665 = vmatpush1.msra.mxu0 %v1644
      %1666 = vmatprep.subr.mxu0 0.0
      %1667 = vmatpush1.msra.mxu0 %v1645
      %1668 = vmatprep.subr.mxu0 0.0
      %1669 = vmatpush1.msra.mxu0 %v1646
      %1670 = vmatprep.subr.mxu0 0.0
      %1671 = vmatpush1.msra.mxu0 %v1647
      %1672 = vmatprep.subr.mxu0 0.0
      %1673 = vmatpush1.msra.mxu0 %v1648
      %1674 = vmatprep.subr.mxu0 0.0
      %1675 = vmatpush1.msra.mxu0 %v1649
      %1676 = vmatprep.subr.mxu0 0.0
      %1677 = vmatpush1.msra.mxu0 %v1650
      %1678 = vmatprep.subr.mxu0 0.0
      %1679 = vmatpush1.msra.mxu0 %v1651
      %1680 = vmatprep.subr.mxu0 0.0
      %1681 = vmatpush1.msra.mxu0 %v1652
      %1682 = vmatprep.subr.mxu0 0.0
      %1683 = vmatpush1.msra.mxu0 %v1653
      %1684 = vmatprep.subr.mxu0 0.0
      %1685 = vmatpush1.msra.mxu0 %v1654
      %1686 = vmatprep.subr.mxu0 0.0
      %1687 = vmatpush1.msra.mxu0 %v1655
      %1688 = vmatprep.subr.mxu0 0.0
      %1689 = vmatpush1.msra.mxu0 0.0
      %1690 = vmatprep.subr.mxu0 0.0
      %1691 = vmatpush1.msra.mxu0 0.0
      %1692 = vmatprep.subr.mxu0 0.0
      %1693 = vmatpush1.msra.mxu0 0.0
      %1694 = vmatprep.subr.mxu0 0.0
      %1695 = vmatpush1.msra.mxu0 0.0
      %1696 = vmatprep.subr.mxu0 0.0
      %1697 = vmatpush1.msra.mxu0 0.0
      %1698 = vmatprep.subr.mxu0 0.0
      %1699 = vmatpush1.msra.mxu0 0.0
      %1700 = vmatprep.subr.mxu0 0.0
      %1701 = vmatpush1.msra.mxu0 0.0
      %1702 = vmatprep.subr.mxu0 0.0
      %1703 = vmatpush1.msra.mxu0 0.0
      %1704 = vmatprep.subr.mxu0 0.0
      %1705 = vmatpush1.msra.mxu0 0.0
      %1706 = vmatprep.subr.mxu0 0.0
      %1707 = vmatpush1.msra.mxu0 0.0
      %1708 = vmatprep.subr.mxu0 0.0
      %1709 = vmatpush1.msra.mxu0 0.0
      %1710 = vmatprep.subr.mxu0 0.0
      %1711 = vmatpush1.msra.mxu0 0.0
      %1712 = vmatprep.subr.mxu0 0.0
      %1713 = vmatpush1.msra.mxu0 0.0
      %1714 = vmatprep.subr.mxu0 0.0
      %1715 = vmatpush1.msra.mxu0 0.0
      %1716 = vmatprep.subr.mxu0 0.0
      %1717 = vmatpush1.msra.mxu0 0.0
      %1718 = vmatprep.subr.mxu0 0.0
      %1719 = vmatpush1.msra.mxu0 0.0
      %1720 = vmatprep.mubr.f32.mxu0 0.0
      %1721 = vmatmul.mubr.f32.gmra.mrb[0].mxu0 %v314
      %v1722 = vpop.f32.mrb[0].mxu0
      %v1723 = vadd.f32 0.0, %v1722
      %v1724 = vpop.f32.mrb[0].mxu0
      %1725 = vmatprep.mubr.f32.mxu0 0.0
      %1726 = vmatmul.mubr.f32.gmra.mrb[0].mxu0 %v316
      %v1727 = vpop.f32.mrb[0].mxu0
      %v1728 = vadd.f32 0.0, %v1727
      %v1729 = vpop.f32.mrb[0].mxu0
      %1730 = vmatprep.mubr.f32.mxu0 0.0
      %1731 = vmatmul.mubr.f32.gmra.mrb[0].mxu0 %v319
      %v1732 = vpop.f32.mrb[0].mxu0
      %v1733 = vadd.f32 0.0, %v1732
      %v1734 = vpop.f32.mrb[0].mxu0
      %1735 = vmatprep.mubr.f32.mxu0 0.0
      %1736 = vmatmul.mubr.f32.gmra.mrb[0].mxu0 %v321
      %v1737 = vpop.f32.mrb[0].mxu0
      %v1738 = vadd.f32 0.0, %v1737
      %v1739 = vpop.f32.mrb[0].mxu0
      %1740 = vmatprep.mubr.f32.mxu0 0.0
      %1741 = vmatmul.mubr.f32.gmra.mrb[0].mxu0 %v324
      %v1742 = vpop.f32.mrb[0].mxu0
      %v1743 = vadd.f32 0.0, %v1742
      %v1744 = vpop.f32.mrb[0].mxu0
      %1745 = vmatprep.mubr.f32.mxu0 0.0
      %1746 = vmatmul.mubr.f32.gmra.mrb[0].mxu0 %v326
      %v1747 = vpop.f32.mrb[0].mxu0
      %v1748 = vadd.f32 0.0, %v1747
      %v1749 = vpop.f32.mrb[0].mxu0
      %1750 = vmatprep.mubr.f32.mxu0 0.0
      %1751 = vmatmul.mubr.f32.gmra.mrb[0].mxu0 %v329
      %v1752 = vpop.f32.mrb[0].mxu0
      %v1753 = vadd.f32 0.0, %v1752
      %v1754 = vpop.f32.mrb[0].mxu0
      %1755 = vmatprep.mubr.f32.mxu0 0.0
      %1756 = vmatmul.mubr.f32.gmra.mrb[0].mxu0 %v331
      %v1757 = vpop.f32.mrb[0].mxu0
      %v1758 = vadd.f32 0.0, %v1757
      %v1759 = vpop.f32.mrb[0].mxu0
      %1760 = vmatprep.mubr.f32.mxu0 0.0
      %1761 = vmatmul.mubr.f32.gmra.mrb[0].mxu0 %v334
      %v1762 = vpop.f32.mrb[0].mxu0
      %v1763 = vadd.f32 0.0, %v1762
      %v1764 = vpop.f32.mrb[0].mxu0
      %1765 = vmatprep.mubr.f32.mxu0 0.0
      %1766 = vmatmul.mubr.f32.gmra.mrb[0].mxu0 %v336
      %v1767 = vpop.f32.mrb[0].mxu0
      %v1768 = vadd.f32 0.0, %v1767
      %v1769 = vpop.f32.mrb[0].mxu0
      %1770 = vmatprep.mubr.f32.mxu0 0.0
      %1771 = vmatmul.mubr.f32.gmra.mrb[0].mxu0 %v339
      %v1772 = vpop.f32.mrb[0].mxu0
      %v1773 = vadd.f32 0.0, %v1772
      %v1774 = vpop.f32.mrb[0].mxu0
      %1775 = vmatprep.mubr.f32.mxu0 0.0
      %1776 = vmatmul.mubr.f32.gmra.mrb[0].mxu0 %v341
      %v1777 = vpop.f32.mrb[0].mxu0
      %v1778 = vadd.f32 0.0, %v1777
      %v1779 = vpop.f32.mrb[0].mxu0
      %1780 = vmatprep.mubr.f32.mxu0 0.0
      %1781 = vmatmul.mubr.f32.gmra.mrb[0].mxu0 %v1083
      %v1782 = vpop.f32.mrb[0].mxu0
      %v1783 = vadd.f32 0.0, %v1782
      %v1784 = vpop.f32.mrb[0].mxu0
      %1785 = vmatprep.mubr.f32.mxu0 0.0
      %1786 = vmatmul.mubr.f32.gmra.mrb[0].mxu0 %v1085
      %v1787 = vpop.f32.mrb[0].mxu0
      %v1788 = vadd.f32 0.0, %v1787
      %v1789 = vpop.f32.mrb[0].mxu0
      %1790 = vmatprep.mubr.f32.mxu0 0.0
      %1791 = vmatmul.mubr.f32.gmra.mrb[0].mxu0 %v1634
      %v1792 = vpop.f32.mrb[0].mxu0
      %v1793 = vadd.f32 0.0, %v1792
      %v1794 = vpop.f32.mrb[0].mxu0
      %1795 = vmatprep.mubr.f32.mxu0 0.0
      %1796 = vmatmul.mubr.f32.gmra.mrb[0].mxu0 %v1636
      %v1797 = vpop.f32.mrb[0].mxu0
      %v1798 = vadd.f32 0.0, %v1797
      %v1799 = vpop.f32.mrb[0].mxu0
      %1800 = vdwg.mxu0
      %v1801 = vadd.f32 %v1613, %v1723
      %v1802 = vadd.f32 %v1614, %v1728
      %v1803 = vadd.f32 %v1615, %v1733
      %v1804 = vadd.f32 %v1616, %v1738
      %v1805 = vadd.f32 %v1617, %v1743
      %v1806 = vadd.f32 %v1618, %v1748
      %v1807 = vadd.f32 %v1619, %v1753
      %v1808 = vadd.f32 %v1620, %v1758
      %v1809 = vadd.f32 %v1621, %v1763
      %v1810 = vadd.f32 %v1622, %v1768
      %v1811 = vadd.f32 %v1623, %v1773
      %v1812 = vadd.f32 %v1624, %v1778
      %v1813 = vadd.f32 %v1625, %v1783
      %v1814 = vadd.f32 %v1626, %v1788
      %v1815 = vadd.f32 %v1627, %v1793
      %v1816 = vadd.f32 %v1628, %v1798
      %v1817 = vrot.slane %v258, 2
      %v1818 = vrot.slane %v259, 2
      %v1819 = vsel %vm665, %v1817, %v1818
      %v1820 = vrot.slane %v260, 2
      %v1821 = vsel %vm665, %v1818, %v1820
      %s1824 = scalar_lea.vmem %s1, 1024
      %v1825 = vld [vmem:[%s1824] sm:$0xff]
      %v1826 = vld [vmem:[%s1824 + $0x8] sm:$0xff]
      %v1827 = vld [vmem:[%s1824 + $0x10] sm:$0xff]
      %v1828 = vld [vmem:[%s1824 + $0x18] sm:$0xff]
      %v1829 = vld [vmem:[%s1824 + $0x20] sm:$0xff]
      %v1830 = vld [vmem:[%s1824 + $0x28] sm:$0xff]
      %v1831 = vld [vmem:[%s1824 + $0x30] sm:$0xff]
      %v1832 = vld [vmem:[%s1824 + $0x38] sm:$0xff]
      %v1833 = vld [vmem:[%s1824 + $0x40] sm:$0xff]
      %v1834 = vld [vmem:[%s1824 + $0x48] sm:$0xff]
      %v1835 = vld [vmem:[%s1824 + $0x50] sm:$0xff]
      %v1836 = vld [vmem:[%s1824 + $0x58] sm:$0xff]
      %v1837 = vld [vmem:[%s1824 + $0x60] sm:$0xff]
      %v1838 = vld [vmem:[%s1824 + $0x68] sm:$0xff]
      %v1839 = vld [vmem:[%s1824 + $0x70] sm:$0xff]
      %v1840 = vld [vmem:[%s1824 + $0x78] sm:$0xff]
      %1841 = vmatprep.subr.mxu0 0.0
      %1842 = vmatpush1.msra.mxu0 %v1825
      %1843 = vmatprep.subr.mxu0 0.0
      %1844 = vmatpush1.msra.mxu0 %v1826
      %1845 = vmatprep.subr.mxu0 0.0
      %1846 = vmatpush1.msra.mxu0 %v1827
      %1847 = vmatprep.subr.mxu0 0.0
      %1848 = vmatpush1.msra.mxu0 %v1828
      %1849 = vmatprep.subr.mxu0 0.0
      %1850 = vmatpush1.msra.mxu0 %v1829
      %1851 = vmatprep.subr.mxu0 0.0
      %1852 = vmatpush1.msra.mxu0 %v1830
      %1853 = vmatprep.subr.mxu0 0.0
      %1854 = vmatpush1.msra.mxu0 %v1831
      %1855 = vmatprep.subr.mxu0 0.0
      %1856 = vmatpush1.msra.mxu0 %v1832
      %1857 = vmatprep.subr.mxu0 0.0
      %1858 = vmatpush1.msra.mxu0 %v1833
      %1859 = vmatprep.subr.mxu0 0.0
      %1860 = vmatpush1.msra.mxu0 %v1834
      %1861 = vmatprep.subr.mxu0 0.0
      %1862 = vmatpush1.msra.mxu0 %v1835
      %1863 = vmatprep.subr.mxu0 0.0
      %1864 = vmatpush1.msra.mxu0 %v1836
      %1865 = vmatprep.subr.mxu0 0.0
      %1866 = vmatpush1.msra.mxu0 %v1837
      %1867 = vmatprep.subr.mxu0 0.0
      %1868 = vmatpush1.msra.mxu0 %v1838
      %1869 = vmatprep.subr.mxu0 0.0
      %1870 = vmatpush1.msra.mxu0 %v1839
      %1871 = vmatprep.subr.mxu0 0.0
      %1872 = vmatpush1.msra.mxu0 %v1840
      %1873 = vmatprep.subr.mxu0 0.0
      %1874 = vmatpush1.msra.mxu0 0.0
      %1875 = vmatprep.subr.mxu0 0.0
      %1876 = vmatpush1.msra.mxu0 0.0
      %1877 = vmatprep.subr.mxu0 0.0
      %1878 = vmatpush1.msra.mxu0 0.0
      %1879 = vmatprep.subr.mxu0 0.0
      %1880 = vmatpush1.msra.mxu0 0.0
      %1881 = vmatprep.subr.mxu0 0.0
      %1882 = vmatpush1.msra.mxu0 0.0
      %1883 = vmatprep.subr.mxu0 0.0
      %1884 = vmatpush1.msra.mxu0 0.0
      %1885 = vmatprep.subr.mxu0 0.0
      %1886 = vmatpush1.msra.mxu0 0.0
      %1887 = vmatprep.subr.mxu0 0.0
      %1888 = vmatpush1.msra.mxu0 0.0
      %1889 = vmatprep.subr.mxu0 0.0
      %1890 = vmatpush1.msra.mxu0 0.0
      %1891 = vmatprep.subr.mxu0 0.0
      %1892 = vmatpush1.msra.mxu0 0.0
      %1893 = vmatprep.subr.mxu0 0.0
      %1894 = vmatpush1.msra.mxu0 0.0
      %1895 = vmatprep.subr.mxu0 0.0
      %1896 = vmatpush1.msra.mxu0 0.0
      %1897 = vmatprep.subr.mxu0 0.0
      %1898 = vmatpush1.msra.mxu0 0.0
      %1899 = vmatprep.subr.mxu0 0.0
      %1900 = vmatpush1.msra.mxu0 0.0
      %1901 = vmatprep.subr.mxu0 0.0
      %1902 = vmatpush1.msra.mxu0 0.0
      %1903 = vmatprep.subr.mxu0 0.0
      %1904 = vmatpush1.msra.mxu0 0.0
      %1905 = vmatprep.mubr.f32.mxu0 0.0
      %1906 = vmatmul.mubr.f32.gmra.mrb[0].mxu0 %v678
      %v1907 = vpop.f32.mrb[0].mxu0
      %v1908 = vadd.f32 0.0, %v1907
      %v1909 = vpop.f32.mrb[0].mxu0
      %1910 = vmatprep.mubr.f32.mxu0 0.0
      %1911 = vmatmul.mubr.f32.gmra.mrb[0].mxu0 %v680
      %v1912 = vpop.f32.mrb[0].mxu0
      %v1913 = vadd.f32 0.0, %v1912
      %v1914 = vpop.f32.mrb[0].mxu0
      %1915 = vmatprep.mubr.f32.mxu0 0.0
      %1916 = vmatmul.mubr.f32.gmra.mrb[0].mxu0 %v683
      %v1917 = vpop.f32.mrb[0].mxu0
      %v1918 = vadd.f32 0.0, %v1917
      %v1919 = vpop.f32.mrb[0].mxu0
      %1920 = vmatprep.mubr.f32.mxu0 0.0
      %1921 = vmatmul.mubr.f32.gmra.mrb[0].mxu0 %v685
      %v1922 = vpop.f32.mrb[0].mxu0
      %v1923 = vadd.f32 0.0, %v1922
      %v1924 = vpop.f32.mrb[0].mxu0
      %1925 = vmatprep.mubr.f32.mxu0 0.0
      %1926 = vmatmul.mubr.f32.gmra.mrb[0].mxu0 %v688
      %v1927 = vpop.f32.mrb[0].mxu0
      %v1928 = vadd.f32 0.0, %v1927
      %v1929 = vpop.f32.mrb[0].mxu0
      %1930 = vmatprep.mubr.f32.mxu0 0.0
      %1931 = vmatmul.mubr.f32.gmra.mrb[0].mxu0 %v690
      %v1932 = vpop.f32.mrb[0].mxu0
      %v1933 = vadd.f32 0.0, %v1932
      %v1934 = vpop.f32.mrb[0].mxu0
      %1935 = vmatprep.mubr.f32.mxu0 0.0
      %1936 = vmatmul.mubr.f32.gmra.mrb[0].mxu0 %v693
      %v1937 = vpop.f32.mrb[0].mxu0
      %v1938 = vadd.f32 0.0, %v1937
      %v1939 = vpop.f32.mrb[0].mxu0
      %1940 = vmatprep.mubr.f32.mxu0 0.0
      %1941 = vmatmul.mubr.f32.gmra.mrb[0].mxu0 %v695
      %v1942 = vpop.f32.mrb[0].mxu0
      %v1943 = vadd.f32 0.0, %v1942
      %v1944 = vpop.f32.mrb[0].mxu0
      %1945 = vmatprep.mubr.f32.mxu0 0.0
      %1946 = vmatmul.mubr.f32.gmra.mrb[0].mxu0 %v698
      %v1947 = vpop.f32.mrb[0].mxu0
      %v1948 = vadd.f32 0.0, %v1947
      %v1949 = vpop.f32.mrb[0].mxu0
      %1950 = vmatprep.mubr.f32.mxu0 0.0
      %1951 = vmatmul.mubr.f32.gmra.mrb[0].mxu0 %v700
      %v1952 = vpop.f32.mrb[0].mxu0
      %v1953 = vadd.f32 0.0, %v1952
      %v1954 = vpop.f32.mrb[0].mxu0
      %1955 = vmatprep.mubr.f32.mxu0 0.0
      %1956 = vmatmul.mubr.f32.gmra.mrb[0].mxu0 %v703
      %v1957 = vpop.f32.mrb[0].mxu0
      %v1958 = vadd.f32 0.0, %v1957
      %v1959 = vpop.f32.mrb[0].mxu0
      %1960 = vmatprep.mubr.f32.mxu0 0.0
      %1961 = vmatmul.mubr.f32.gmra.mrb[0].mxu0 %v705
      %v1962 = vpop.f32.mrb[0].mxu0
      %v1963 = vadd.f32 0.0, %v1962
      %v1964 = vpop.f32.mrb[0].mxu0
      %1965 = vmatprep.mubr.f32.mxu0 0.0
      %1966 = vmatmul.mubr.f32.gmra.mrb[0].mxu0 %v1268
      %v1967 = vpop.f32.mrb[0].mxu0
      %v1968 = vadd.f32 0.0, %v1967
      %v1969 = vpop.f32.mrb[0].mxu0
      %1970 = vmatprep.mubr.f32.mxu0 0.0
      %1971 = vmatmul.mubr.f32.gmra.mrb[0].mxu0 %v1270
      %v1972 = vpop.f32.mrb[0].mxu0
      %v1973 = vadd.f32 0.0, %v1972
      %v1974 = vpop.f32.mrb[0].mxu0
      %1975 = vmatprep.mubr.f32.mxu0 0.0
      %1976 = vmatmul.mubr.f32.gmra.mrb[0].mxu0 %v1819
      %v1977 = vpop.f32.mrb[0].mxu0
      %v1978 = vadd.f32 0.0, %v1977
      %v1979 = vpop.f32.mrb[0].mxu0
      %1980 = vmatprep.mubr.f32.mxu0 0.0
      %1981 = vmatmul.mubr.f32.gmra.mrb[0].mxu0 %v1821
      %v1982 = vpop.f32.mrb[0].mxu0
      %v1983 = vadd.f32 0.0, %v1982
      %v1984 = vpop.f32.mrb[0].mxu0
      %1985 = vdwg.mxu0
      %v1986 = vadd.f32 %v1801, %v1908
      %v1987 = vadd.f32 %v1802, %v1913
      %v1988 = vadd.f32 %v1803, %v1918
      %v1989 = vadd.f32 %v1804, %v1923
      %v1990 = vadd.f32 %v1805, %v1928
      %v1991 = vadd.f32 %v1806, %v1933
      %v1992 = vadd.f32 %v1807, %v1938
      %v1993 = vadd.f32 %v1808, %v1943
      %v1994 = vadd.f32 %v1809, %v1948
      %v1995 = vadd.f32 %v1810, %v1953
      %v1996 = vadd.f32 %v1811, %v1958
      %v1997 = vadd.f32 %v1812, %v1963
      %v1998 = vadd.f32 %v1813, %v1968
      %v1999 = vadd.f32 %v1814, %v1973
      %v2000 = vadd.f32 %v1815, %v1978
      %v2001 = vadd.f32 %v1816, %v1983
      %2002 = vst [vmem:[%s221] sm:$0xff] %v1986
      %2003 = vst [vmem:[%s221 + $0x8] sm:$0xff] %v1987
      %2004 = vst [vmem:[%s221 + $0x10] sm:$0xff] %v1988
      %2005 = vst [vmem:[%s221 + $0x18] sm:$0xff] %v1989
      %2006 = vst [vmem:[%s221 + $0x20] sm:$0xff] %v1990
      %2007 = vst [vmem:[%s221 + $0x28] sm:$0xff] %v1991
      %2008 = vst [vmem:[%s221 + $0x30] sm:$0xff] %v1992
      %2009 = vst [vmem:[%s221 + $0x38] sm:$0xff] %v1993
      %2010 = vst [vmem:[%s221 + $0x40] sm:$0xff] %v1994
      %2011 = vst [vmem:[%s221 + $0x48] sm:$0xff] %v1995
      %2012 = vst [vmem:[%s221 + $0x50] sm:$0xff] %v1996
      %2013 = vst [vmem:[%s221 + $0x58] sm:$0xff] %v1997
      %2014 = vst [vmem:[%s221 + $0x60] sm:$0xff] %v1998
      %2015 = vst [vmem:[%s221 + $0x68] sm:$0xff] %v1999
      %2016 = vst [vmem:[%s221 + $0x70] sm:$0xff] %v2000
      %2017 = vst [vmem:[%s221 + $0x78] sm:$0xff] %v2001
      %v2018 = vadd.f32 %v1986, %v1987
      %v2019 = vadd.f32 %v2018, %v1988
      %v2020 = vadd.f32 %v2019, %v1989
      %v2021 = vadd.f32 %v2020, %v1990
      %v2022 = vadd.f32 %v2021, %v1991
      %v2023 = vadd.f32 %v2022, %v1992
      %v2024 = vadd.f32 %v2023, %v1993
      %v2025 = vadd.f32 %v2024, %v1994
      %v2026 = vadd.f32 %v2025, %v1995
      %v2027 = vadd.f32 %v2026, %v1996
      %v2028 = vadd.f32 %v2027, %v1997
      %v2029 = vadd.f32 %v2028, %v1998
      %v2030 = vadd.f32 %v2029, %v1999
      %v2031 = vadd.f32 %v2030, %v2000
      %v2032 = vadd.f32 %v2031, %v2001
      %v2033 = vrot.slane %v2032, 4
      %v2034 = vadd.f32 %v2032, %v2033
      %v2035 = vrot.slane %v2034, 2
      %v2036 = vadd.f32 %v2034, %v2035
      %v2037 = vrot.slane %v2036, 1
      %v2038 = vadd.f32 %v2036, %v2037
      %v2039 = vmul.f32 %v1986, %v1986
      %v2040 = vmul.f32 %v1987, %v1987
      %v2041 = vmul.f32 %v1988, %v1988
      %v2042 = vmul.f32 %v1989, %v1989
      %v2043 = vmul.f32 %v1990, %v1990
      %v2044 = vmul.f32 %v1991, %v1991
      %v2045 = vmul.f32 %v1992, %v1992
      %v2046 = vmul.f32 %v1993, %v1993
      %v2047 = vmul.f32 %v1994, %v1994
      %v2048 = vmul.f32 %v1995, %v1995
      %v2049 = vmul.f32 %v1996, %v1996
      %v2050 = vmul.f32 %v1997, %v1997
      %v2051 = vmul.f32 %v1998, %v1998
      %v2052 = vmul.f32 %v1999, %v1999
      %v2053 = vmul.f32 %v2000, %v2000
      %v2054 = vmul.f32 %v2001, %v2001
      %v2055 = vadd.f32 %v2039, %v2040
      %v2056 = vadd.f32 %v2055, %v2041
      %v2057 = vadd.f32 %v2056, %v2042
      %v2058 = vadd.f32 %v2057, %v2043
      %v2059 = vadd.f32 %v2058, %v2044
      %v2060 = vadd.f32 %v2059, %v2045
      %v2061 = vadd.f32 %v2060, %v2046
      %v2062 = vadd.f32 %v2061, %v2047
      %v2063 = vadd.f32 %v2062, %v2048
      %v2064 = vadd.f32 %v2063, %v2049
      %v2065 = vadd.f32 %v2064, %v2050
      %v2066 = vadd.f32 %v2065, %v2051
      %v2067 = vadd.f32 %v2066, %v2052
      %v2068 = vadd.f32 %v2067, %v2053
      %v2069 = vadd.f32 %v2068, %v2054
      %v2070 = vrot.slane %v2069, 4
      %v2071 = vadd.f32 %v2069, %v2070
      %v2072 = vrot.slane %v2071, 2
      %v2073 = vadd.f32 %v2071, %v2072
      %v2074 = vrot.slane %v2073, 1
      %v2075 = vadd.f32 %v2073, %v2074
      %vm2076 = vcmask 1040384
      %v2077 = vsel %vm2076, %v2038, %v2075
      %2078 = vst [vmem:[%s228] sm:$0x3] %v2077
      %s2079 = smul.u32 8, %s20
      %p2080 = scmp.lt.s32.totalorder %s19, 1
      %s2081 = scalar_select %p2080, %s19, 1
      %p2082 = scmp.lt.s32.totalorder %s2079, 15
      %s2083 = scalar_select %p2082, %s2079, 15
      %s2084 = smul.addr %s2083, 2
      %s2085 = smul.addr %s2081, 32
      %s2086 = sadd.s32 %s2084, %s2085
      %s2087 = smul.addr %s2086, 8
      %s2088 = scalar_lea.vmem %s2, %s2087
      %s2089 = smul.u32 %s19, 2
      %s2090 = sadd.s32 %s2089, %s20
      %p2091 = scmp.lt.s32.totalorder %s2090, 3
      %s2092 = scalar_select %p2091, %s2090, 3
      %s2093 = smul.addr %s2092, 2
      %s2094 = scalar_lea.vmem %s3, %s2093
      // Predicated region
      $region29: #{basic_block_forward.6} parent=27 // pred_check
        %p2095 = pneg %p98
      $region30: #{basic_block_forward.6} parent=27 // pred_check_branch
        %2097 = sbr.rel (%p2095) target = $region32
      $region31: #{basic_block_forward.6} parent=27 // pred_region
        %s2098 = smul.u32 8, %s20
      $region32: #{basic_block_forward.6} parent=27 // pred_fallthru
        _
      // Predicated region
      $region33: #{basic_block_forward.6} parent=27 // pred_check
        %p2099 = pneg %p128
      $region34: #{basic_block_forward.6} parent=27 // pred_check_branch
        %2101 = sbr.rel (%p2099) target = $region36
      $region35: #{basic_block_forward.6} parent=27 // pred_region
        %s2102 = smul.u32 %s19, 2
        %s2103 = sadd.s32 %s2102, %s20
      $region36: #{basic_block_forward.6} parent=27 // pred_fallthru
        _
    $region28: #{basic_block_forward.6} parent=5 // pred_fallthru
      _
    %p2104 = scmp.le.s32.totalorder 2, %s10
    // Predicated region
    $region37: #{basic_block_forward.6} parent=5 // pred_check
      %p2105 = pneg %p2104
    $region38: #{basic_block_forward.6} parent=5 // pred_check_branch
      %2107 = sbr.rel (%p2105) target = $region40
    $region39: #{basic_block_forward.6} parent=5 // pred_region
      %s2108 = ssub.s32 %s10, 2
      // Predicated region
      $region41: #{basic_block_forward.6} parent=39 // pred_check
        %p2109 = pneg %p104
      $region42: #{basic_block_forward.6} parent=39 // pred_check_branch
        %2111 = sbr.rel (%p2109) target = $region44
      $region43: #{basic_block_forward.6} parent=39 // pred_region
        %s2112 = smul.u32 8, %s22
        %p2113 = scmp.lt.s32.totalorder %s21, 1
        %s2114 = scalar_select %p2113, %s21, 1
        %p2115 = scmp.lt.s32.totalorder %s2112, 15
        %s2116 = scalar_select %p2115, %s2112, 15
        %s2117 = smul.addr %s2116, 2
        %s2118 = smul.addr %s2114, 32
        %s2119 = sadd.s32 %s2117, %s2118
        %s2120 = smul.addr %s2119, 8
        %s2121 = scalar_lea.vmem %s2, %s2120
      $region44: #{basic_block_forward.6} parent=39 // pred_fallthru
        _
      // Predicated region
      $region45: #{basic_block_forward.6} parent=39 // pred_check
        %p2122 = pneg %p134
      $region46: #{basic_block_forward.6} parent=39 // pred_check_branch
        %2124 = sbr.rel (%p2122) target = $region48
      $region47: #{basic_block_forward.6} parent=39 // pred_region
        %s2125 = smul.u32 %s21, 2
        %s2126 = sadd.s32 %s2125, %s22
        %p2127 = scmp.lt.s32.totalorder %s2126, 3
        %s2128 = scalar_select %p2127, %s2126, 3
        %s2129 = smul.addr %s2128, 2
        %s2130 = scalar_lea.vmem %s3, %s2129
      $region48: #{basic_block_forward.6} parent=39 // pred_fallthru
        _
    $region40: #{basic_block_forward.6} parent=5 // pred_fallthru
      _
  $region6: #{basic_block_forward.6} parent=0 // loop_footer
    %s14 = sadd.s32 1, %s10
  $region7: #{basic_block_forward.6} parent=0 // loop_footer_branch
    %9 = sbr.rel target = $region3
  $region8: #{basic_block_forward.6} parent=0 // loop_exit
    _

</llo_original>
